<compile_context>
chip_gen: v7x
topology: tpu7x:2x2x1
jax: 0.10.0
libtpu: 0.0.40
codegen_flags: <defaults>
</compile_context>

<pallas_src>
import functools

import numpy as np
import jax
import jax.numpy as jnp
from jax.experimental import pallas as pl
from jax.experimental.pallas import tpu as pltpu


# ---------------------------------------------------------------------------
# Kernel
# ---------------------------------------------------------------------------
def _irb_kernel(x_ref, m_ref, w1_ref, b1_ref, wdw_ref, bdw_ref, w2_ref, b2_ref,
                *rest, H, W, stride, residual, nb, pad, out_w,
                mm_dtype, dw_dtype):
    if stride > 1:
        selw_ref, o_ref, pad_ref = rest
    else:
        o_ref, pad_ref = rest
        selw_ref = None

    HW = H * W
    Ho = (H - 1) // stride + 1
    Wo = (W - 1) // stride + 1
    HoWo = Ho * Wo
    Cm = w1_ref.shape[0]
    Cout = w2_ref.shape[0]

    # Re-zero only the halo borders of the lane-padded depthwise scratch (the
    # interior is fully overwritten for every image).  Not program_id-guarded:
    # "parallel" grid steps may run on different cores with private scratch.
    zeros_halo = jnp.zeros((Cm, pad), dw_dtype)
    pad_ref[:, :pad] = zeros_halo
    pad_ref[:, pad + HW:] = zeros_halo

    # Hoisted parameter loads (BN scales already folded into the weights).
    w1 = w1_ref[...].astype(mm_dtype)                  # (Cm, Cin)
    w2 = w2_ref[...].astype(mm_dtype)                  # (Cout, Cm)
    b1 = b1_ref[...]                                   # (Cm, 1)  f32
    b2 = b2_ref[...]                                   # (Cout, 1) f32
    bdw = bdw_ref[...].astype(dw_dtype)                # (Cm, 1)
    wt = [wdw_ref[k].astype(dw_dtype) for k in range(9)]   # 9 x (Cm, 1)
    mask_l = m_ref[0:1, :].astype(dw_dtype)            # (1, HW): 0 where x == 0
    mask_r = m_ref[1:2, :].astype(dw_dtype)            # (1, HW): 0 where x == W-1

    # ---- 1x1 expansion conv (+ folded BN) + ReLU6, all nb images at once ----
    xs = [x_ref[n] for n in range(nb)]                 # nb x (Cin, HW)
    x_all = xs[0] if nb == 1 else jnp.concatenate(xs, axis=-1)
    t_all = jnp.dot(w1, x_all.astype(mm_dtype),
                    preferred_element_type=jnp.float32)          # (Cm, nb*HW)
    t_all = jnp.clip(t_all + b1, 0.0, 6.0).astype(dw_dtype)

    if stride > 1:
        ml_row = mask_l[:, :W]
        mr_row = mask_r[:, :W]
        selw = selw_ref[...].astype(mm_dtype)          # (W, Wo) column selector

    # ---- depthwise 3x3 (pad=1): the intrinsically per-image part -----------
    d_parts = []
    for n in range(nb):
        t = t_all[:, n * HW:(n + 1) * HW]              # (Cm, HW), lane-aligned
        pad_ref[:, pad:pad + HW] = t

        if stride == 1:
            sh = lambda off: pad_ref[:, pad + off:pad + off + HW]
            # Column-factored edge masks: the zeroed halo already covers the
            # dy = +/-1 out-of-bounds rows, so only dx = -1 / +1 need a mask.
            center = t * wt[4] + sh(-W) * wt[1] + sh(W) * wt[7] + bdw
            left = sh(-W - 1) * wt[0] + sh(-1) * wt[3] + sh(W - 1) * wt[6]
            right = sh(-W + 1) * wt[2] + sh(1) * wt[5] + sh(W + 1) * wt[8]
            d = jnp.clip(center + mask_l * left + mask_r * right, 0.0, 6.0)
            d = d.astype(mm_dtype)                     # (Cm, HW == HoWo)
        else:
            # Only the needed output rows are computed; the column stride is
            # applied with a tiny (W, Wo) selection matmul per row (no
            # (HW, HoWo) selection matrix / O(Cm*HW*HoWo) wasted MACs).
            rows = []
            for yo in range(Ho):
                base = yo * stride * W
                rv = lambda off: pad_ref[:, pad + base + off:
                                         pad + base + off + W]
                center = rv(0) * wt[4] + rv(-W) * wt[1] + rv(W) * wt[7] + bdw
                left = rv(-W - 1) * wt[0] + rv(-1) * wt[3] + rv(W - 1) * wt[6]
                right = rv(-W + 1) * wt[2] + rv(1) * wt[5] + rv(W + 1) * wt[8]
                drow = jnp.clip(center + ml_row * left + mr_row * right,
                                0.0, 6.0)
                rows.append(jnp.dot(drow.astype(mm_dtype), selw,
                                    preferred_element_type=jnp.float32))
            d = jnp.concatenate(rows, axis=-1).astype(mm_dtype)   # (Cm, HoWo)

        if out_w > HoWo:                 # keep projection/store lane-dense
            d = jnp.concatenate(
                [d, jnp.zeros((Cm, out_w - HoWo), d.dtype)], axis=-1)
        d_parts.append(d)

    # ---- 1x1 projection conv (+ folded BN), all nb images at once ----------
    d_all = d_parts[0] if nb == 1 else jnp.concatenate(d_parts, axis=-1)
    out_all = jnp.dot(w2, d_all,
                      preferred_element_type=jnp.float32) + b2   # (Cout, nb*out_w)

    for n in range(nb):
        o = out_all[:, n * out_w:(n + 1) * out_w]
        if residual:                                    # stride==1, Cin==Cout
            xn = x_ref[n]                               # (Cout, HW)
            if out_w > HW:
                xn = jnp.concatenate(
                    [xn, jnp.zeros((Cout, out_w - HW), xn.dtype)], axis=-1)
            o = o + xn
        o_ref[n] = o.astype(o_ref.dtype)                # lane-dense full store


# ---------------------------------------------------------------------------
# Host-side helpers
# ---------------------------------------------------------------------------
def _col_masks(H, W):
    """(2, H*W) f32 masks: row0 zero where x==0, row1 zero where x==W-1."""
    x = np.tile(np.arange(W), H)
    left = (x > 0).astype(np.float32)
    right = (x < W - 1).astype(np.float32)
    return jnp.asarray(np.stack([left, right], axis=0))


def _col_select(W, s):
    """(W, Wo) 0/1 matrix selecting every s-th column of a W-wide row."""
    Wo = (W - 1) // s + 1
    sel = np.zeros((W, Wo), np.float32)
    for xo in range(Wo):
        sel[xo * s, xo] = 1.0
    return jnp.asarray(sel)


def _full_spec(a):
    nd = a.ndim
    return pl.BlockSpec(a.shape, lambda g, _n=nd: (0,) * _n)


def _vmem_capacity_bytes():
    try:
        return int(pltpu.get_tpu_info().vmem_capacity_bytes)
    except Exception:
        return 64 * 1024 * 1024       # conservative fallback (v7x per-core VMEM)


def _choose_nb(N, Cin, Cm, Cout, HW, out_w, pad, x_bytes, dw_bytes, vmem_cap):
    """Images fused per grid step, from a per-generation VMEM budget."""
    budget = int(0.55 * vmem_cap)
    # Double-buffered x/out blocks + live intermediates (t, acc/d, out) per image.
    per_img = 2 * (Cin * HW + Cout * out_w) * x_bytes
    per_img += (Cin * HW + Cout * out_w) * 4
    per_img += 2 * Cm * HW * dw_bytes + Cm * out_w * 4
    fixed = Cm * (HW + 2 * pad) * dw_bytes                       # halo scratch
    fixed += 8 * (Cm * Cin + Cout * Cm + 16 * Cm + Cout + 2 * HW)  # params+masks
    fixed += 2 << 20                                             # headroom
    nb = max(1, min(N, (budget - fixed) // max(per_img, 1)))
    if N > 1:            # keep >=2 "parallel" grid steps so both v7x TCs work
        nb = min(nb, max(1, N // 2))
    while N % nb:
        nb -= 1
    return int(nb)


def inverted_residual_block(x_nchw, folded, *, stride=1,
                            matmul_dtype=jnp.bfloat16, depthwise_dtype=None,
                            batch_block=None):
    """x_nchw: (N, Cin, H, W) PyTorch layout.  Returns (N, Cout, Ho, Wo).

    matmul_dtype: MXU input dtype (bf16 default; pass jnp.float32 for an exact
    reference check).  depthwise_dtype: VPU dtype of the depthwise elementwise
    path; defaults to matmul_dtype -- pass jnp.float32 on v5e (no bf16 VALU).
    """
    N, Cin, H, W = x_nchw.shape
    Cm, Cout = folded["w1"].shape[0], folded["w2"].shape[0]
    residual = (Cin == Cout) and (stride == 1)
    Ho, Wo = (H - 1) // stride + 1, (W - 1) // stride + 1
    HW, HoWo = H * W, Ho * Wo
    pad = -(-(W + 1) // 128) * 128            # 128-aligned lane halo >= W+1
    out_w = max(128, -(-HoWo // 128) * 128)   # lane-dense unmasked stores

    dw_dtype = matmul_dtype if depthwise_dtype is None else depthwise_dtype
    x_bytes = jnp.dtype(x_nchw.dtype).itemsize
    dw_bytes = jnp.dtype(dw_dtype).itemsize

    vmem_cap = _vmem_capacity_bytes()
    if batch_block is None:
        nb = _choose_nb(N, Cin, Cm, Cout, HW, out_w, pad,
                        x_bytes, dw_bytes, vmem_cap)
    else:
        nb = batch_block
        assert N % nb == 0
    grid = (N // nb,)

    x_flat = x_nchw.reshape(N, Cin, HW)       # free reshape of NCHW
    masks = _col_masks(H, W)                  # (2, HW) left/right edge masks

    inputs = [x_flat, masks, folded["w1"], folded["b1"], folded["wdw"],
              folded["bdw"], folded["w2"], folded["b2"]]
    in_specs = [pl.BlockSpec((nb, Cin, HW), lambda g: (g, 0, 0))]
    in_specs += [_full_spec(a) for a in inputs[1:]]
    if stride > 1:
        selw = _col_select(W, stride)         # tiny (W, Wo) column selector
        inputs.append(selw)
        in_specs.append(_full_spec(selw))

    kernel = functools.partial(
        _irb_kernel, H=H, W=W, stride=stride, residual=residual, nb=nb,
        pad=pad, out_w=out_w, mm_dtype=matmul_dtype, dw_dtype=dw_dtype)

    out = pl.pallas_call(
        kernel,
        out_shape=jax.ShapeDtypeStruct((N, Cout, out_w), x_nchw.dtype),
        grid=grid,
        in_specs=in_specs,
        out_specs=pl.BlockSpec((nb, Cout, out_w), lambda g: (g, 0, 0)),
        scratch_shapes=[pltpu.VMEM((Cm, HW + 2 * pad), dw_dtype)],
        compiler_params=pltpu.CompilerParams(
            dimension_semantics=("parallel",),
            vmem_limit_bytes=int(min(0.9 * vmem_cap, 100 * 2**20))),
    )(*inputs)

    if out_w > HoWo:
        out = out[:, :, :HoWo]
    return out.reshape(N, Cout, Ho, Wo)       # free reshape back


# ---------------------------------------------------------------------------
# Parameters: raw (PyTorch-like) + BN folding
# ---------------------------------------------------------------------------
def init_params(key, in_planes, out_planes, expansion, dtype=jnp.float32):
    """Synthetic weights mimicking the PyTorch module (eval-mode BN stats)."""
    Cm = in_planes * expansion
    k = jax.random.split(key, 6)

    def bn_params(kk, c):
        k0, k1, k2, k3 = jax.random.split(kk, 4)
        return dict(gamma=jax.random.uniform(k0, (c,), dtype, 0.5, 1.5),
                    beta=0.1 * jax.random.normal(k1, (c,), dtype),
                    mean=0.1 * jax.random.normal(k2, (c,), dtype),
                    var=jax.random.uniform(k3, (c,), dtype, 0.5, 1.5))

    return dict(
        w1=jax.random.normal(k[0], (Cm, in_planes), dtype) / np.sqrt(in_planes),
        bn1=bn_params(k[1], Cm),
        wdw=jax.random.normal(k[2], (Cm, 9), dtype) / 3.0,     # 3x3 taps / chan
        bn2=bn_params(k[3], Cm),
        w2=jax.random.normal(k[4], (out_planes, Cm), dtype) / np.sqrt(Cm),
        bn3=bn_params(k[5], out_planes),
    )


def fold_params(p, eps=1e-5):
    """Fold BN (inference) scale into the conv weights; keep bias columns."""
    def sb(bn):
        s = bn["gamma"] / jnp.sqrt(bn["var"] + eps)
        return s, bn["beta"] - bn["mean"] * s

    s1, b1 = sb(p["bn1"])
    s2, b2 = sb(p["bn2"])
    s3, b3 = sb(p["bn3"])
    return dict(
        w1=p["w1"] * s1[:, None],                       # (Cm, Cin)
        b1=b1[:, None],                                 # (Cm, 1)
        wdw=(p["wdw"] * s2[:, None]).T[:, :, None],     # (9, Cm, 1)
        bdw=b2[:, None],                                # (Cm, 1)
        w2=p["w2"] * s3[:, None],                       # (Cout, Cm)
        b2=b3[:, None],                                 # (Cout, 1)
    )


# ---------------------------------------------------------------------------
# Independent pure-JAX reference (literal translation of the PyTorch module)
# ---------------------------------------------------------------------------
def ref_forward(x, p, *, stride=1, eps=1e-5):
    def bn(v, b):
        s = b["gamma"] / jnp.sqrt(b["var"] + eps)
        return (v * s[None, :, None, None]
                + (b["beta"] - b["mean"] * s)[None, :, None, None])

    def conv(v, w, stride=1, groups=1, padding=0):
        return jax.lax.conv_general_dilated(
            v, w, window_strides=(stride, stride),
            padding=[(padding, padding)] * 2,
            dimension_numbers=("NCHW", "OIHW", "NCHW"),
            feature_group_count=groups,
            precision=jax.lax.Precision.HIGHEST)

    Cin = x.shape[1]
    Cm = p["w1"].shape[0]
    Cout = p["w2"].shape[0]
    t = jnp.clip(bn(conv(x, p["w1"][:, :, None, None]), p["bn1"]), 0.0, 6.0)
    t = jnp.clip(bn(conv(t, p["wdw"].reshape(Cm, 1, 3, 3),
                         stride=stride, groups=Cm, padding=1), p["bn2"]),
                 0.0, 6.0)
    out = bn(conv(t, p["w2"][:, :, None, None]), p["bn3"])
    if Cin == Cout and stride == 1:
        out = out + x
    return out


# ---------------------------------------------------------------------------
if __name__ == "__main__":
    key = jax.random.PRNGKey(0)
    kx, kp = jax.random.split(key)

    # Module config: in_planes=4, out_planes=4, expansion_factor=6, stride=1
    N, Cin, H, W = 2, 4, 16, 16
    Cout, expansion, stride = 4, 6, 1

    x = jax.random.normal(kx, (N, Cin, H, W), jnp.float32)   # PyTorch NCHW
    raw = init_params(kp, Cin, Cout, expansion)
    folded = fold_params(raw)
    ref = ref_forward(x, raw, stride=stride)

    # Exact-check path: f32 MXU + f32 depthwise.
    out_f32 = inverted_residual_block(x, folded, stride=stride,
                                      matmul_dtype=jnp.float32)
    out_f32 = jax.block_until_ready(out_f32)
    assert out_f32.shape == ref.shape, (out_f32.shape, ref.shape)
    err = float(jnp.max(jnp.abs(out_f32 - ref)))
    assert jnp.allclose(out_f32, ref, atol=1e-3, rtol=1e-3), f"f32 mismatch: {err}"

    # Default fast path: bf16 MXU inputs + bf16 depthwise VALU (f32 accumulate).
    out_bf16 = jax.block_until_ready(
        inverted_residual_block(x, folded, stride=stride))
    err_bf16 = float(jnp.max(jnp.abs(out_bf16.astype(jnp.float32) - ref)))
    assert err_bf16 < 0.5, f"bf16 deviation too large: {err_bf16}"

    print("KERNEL_OK")
</pallas_src>

<mosaic_0001>
module attributes {stable_mosaic.version = 11 : i64} {
  func.func @_irb_kernel(%arg0: i32, %arg1: memref<1x4x256xf32, #tpu.memory_space<vmem>>, %arg2: memref<2x256xf32, #tpu.memory_space<vmem>>, %arg3: memref<24x4xf32, #tpu.memory_space<vmem>>, %arg4: memref<24x1xf32, #tpu.memory_space<vmem>>, %arg5: memref<9x24x1xf32, #tpu.memory_space<vmem>>, %arg6: memref<24x1xf32, #tpu.memory_space<vmem>>, %arg7: memref<4x24xf32, #tpu.memory_space<vmem>>, %arg8: memref<4x1xf32, #tpu.memory_space<vmem>>, %arg9: memref<1x4x256xf32, #tpu.memory_space<vmem>>, %arg10: memref<24x512xf32, #tpu.memory_space<vmem>>) attributes {dimension_semantics = [#tpu.dimension_semantics<parallel>], iteration_bounds = array<i64: 2>, scalar_prefetch = 0 : i64, scratch_operands = 1 : i64, tpu.core_type = #tpu.core_type<tc>, window_params = [{transform_indices = @transform_0, window_bounds = array<i64: 1, 4, 256>}, {pipeline_mode = #tpu.pipeline_mode<synchronous>, transform_indices = @transform_1, window_bounds = array<i64: 2, 256>}, {pipeline_mode = #tpu.pipeline_mode<synchronous>, transform_indices = @transform_2, window_bounds = array<i64: 24, 4>}, {pipeline_mode = #tpu.pipeline_mode<synchronous>, transform_indices = @transform_3, window_bounds = array<i64: 24, 1>}, {pipeline_mode = #tpu.pipeline_mode<synchronous>, transform_indices = @transform_4, window_bounds = array<i64: 9, 24, 1>}, {pipeline_mode = #tpu.pipeline_mode<synchronous>, transform_indices = @transform_5, window_bounds = array<i64: 24, 1>}, {pipeline_mode = #tpu.pipeline_mode<synchronous>, transform_indices = @transform_6, window_bounds = array<i64: 4, 24>}, {pipeline_mode = #tpu.pipeline_mode<synchronous>, transform_indices = @transform_7, window_bounds = array<i64: 4, 1>}, {transform_indices = @transform_8, window_bounds = array<i64: 1, 4, 256>}]} {
    %cst = arith.constant 0.000000e+00 : f32
    %0 = vector.broadcast %cst : f32 to vector<24x128xf32>
    %c0 = arith.constant 0 : index
    %c0_0 = arith.constant 0 : index
    %1 = vector.load %arg10[%c0, %c0_0] : memref<24x512xf32, #tpu.memory_space<vmem>>, vector<24x128xf32>
    tpu.vector_store %arg10[%c0, %c0_0], %0 {strides = array<i32>} : memref<24x512xf32, #tpu.memory_space<vmem>>, vector<24x128xf32>,
    %c0_1 = arith.constant 0 : index
    %c384 = arith.constant 384 : index
    %2 = vector.load %arg10[%c0_1, %c384] : memref<24x512xf32, #tpu.memory_space<vmem>>, vector<24x128xf32>
    tpu.vector_store %arg10[%c0_1, %c384], %0 {strides = array<i32>} : memref<24x512xf32, #tpu.memory_space<vmem>>, vector<24x128xf32>,
    %c0_2 = arith.constant 0 : index
    %c0_3 = arith.constant 0 : index
    %3 = vector.load %arg3[%c0_2, %c0_3] : memref<24x4xf32, #tpu.memory_space<vmem>>, vector<24x4xf32>
    %c0_4 = arith.constant 0 : index
    %c0_5 = arith.constant 0 : index
    %4 = vector.load %arg7[%c0_4, %c0_5] : memref<4x24xf32, #tpu.memory_space<vmem>>, vector<4x24xf32>
    %c0_6 = arith.constant 0 : index
    %c0_7 = arith.constant 0 : index
    %5 = vector.load %arg4[%c0_6, %c0_7] : memref<24x1xf32, #tpu.memory_space<vmem>>, vector<24x1xf32>
    %c0_8 = arith.constant 0 : index
    %c0_9 = arith.constant 0 : index
    %6 = vector.load %arg8[%c0_8, %c0_9] : memref<4x1xf32, #tpu.memory_space<vmem>>, vector<4x1xf32>
    %c0_10 = arith.constant 0 : index
    %c0_11 = arith.constant 0 : index
    %7 = vector.load %arg6[%c0_10, %c0_11] : memref<24x1xf32, #tpu.memory_space<vmem>>, vector<24x1xf32>
    %c0_12 = arith.constant 0 : index
    %c0_13 = arith.constant 0 : index
    %c0_14 = arith.constant 0 : index
    %8 = vector.load %arg5[%c0_12, %c0_13, %c0_14] : memref<9x24x1xf32, #tpu.memory_space<vmem>>, vector<1x24x1xf32>
    %9 = vector.shape_cast %8 : vector<1x24x1xf32> to vector<24x1xf32>
    %c1 = arith.constant 1 : index
    %c0_15 = arith.constant 0 : index
    %c0_16 = arith.constant 0 : index
    %10 = vector.load %arg5[%c1, %c0_15, %c0_16] : memref<9x24x1xf32, #tpu.memory_space<vmem>>, vector<1x24x1xf32>
    %11 = vector.shape_cast %10 : vector<1x24x1xf32> to vector<24x1xf32>
    %c2 = arith.constant 2 : index
    %c0_17 = arith.constant 0 : index
    %c0_18 = arith.constant 0 : index
    %12 = vector.load %arg5[%c2, %c0_17, %c0_18] : memref<9x24x1xf32, #tpu.memory_space<vmem>>, vector<1x24x1xf32>
    %13 = vector.shape_cast %12 : vector<1x24x1xf32> to vector<24x1xf32>
    %c3 = arith.constant 3 : index
    %c0_19 = arith.constant 0 : index
    %c0_20 = arith.constant 0 : index
    %14 = vector.load %arg5[%c3, %c0_19, %c0_20] : memref<9x24x1xf32, #tpu.memory_space<vmem>>, vector<1x24x1xf32>
    %15 = vector.shape_cast %14 : vector<1x24x1xf32> to vector<24x1xf32>
    %c4 = arith.constant 4 : index
    %c0_21 = arith.constant 0 : index
    %c0_22 = arith.constant 0 : index
    %16 = vector.load %arg5[%c4, %c0_21, %c0_22] : memref<9x24x1xf32, #tpu.memory_space<vmem>>, vector<1x24x1xf32>
    %17 = vector.shape_cast %16 : vector<1x24x1xf32> to vector<24x1xf32>
    %c5 = arith.constant 5 : index
    %c0_23 = arith.constant 0 : index
    %c0_24 = arith.constant 0 : index
    %18 = vector.load %arg5[%c5, %c0_23, %c0_24] : memref<9x24x1xf32, #tpu.memory_space<vmem>>, vector<1x24x1xf32>
    %19 = vector.shape_cast %18 : vector<1x24x1xf32> to vector<24x1xf32>
    %c6 = arith.constant 6 : index
    %c0_25 = arith.constant 0 : index
    %c0_26 = arith.constant 0 : index
    %20 = vector.load %arg5[%c6, %c0_25, %c0_26] : memref<9x24x1xf32, #tpu.memory_space<vmem>>, vector<1x24x1xf32>
    %21 = vector.shape_cast %20 : vector<1x24x1xf32> to vector<24x1xf32>
    %c7 = arith.constant 7 : index
    %c0_27 = arith.constant 0 : index
    %c0_28 = arith.constant 0 : index
    %22 = vector.load %arg5[%c7, %c0_27, %c0_28] : memref<9x24x1xf32, #tpu.memory_space<vmem>>, vector<1x24x1xf32>
    %23 = vector.shape_cast %22 : vector<1x24x1xf32> to vector<24x1xf32>
    %c8 = arith.constant 8 : index
    %c0_29 = arith.constant 0 : index
    %c0_30 = arith.constant 0 : index
    %24 = vector.load %arg5[%c8, %c0_29, %c0_30] : memref<9x24x1xf32, #tpu.memory_space<vmem>>, vector<1x24x1xf32>
    %25 = vector.shape_cast %24 : vector<1x24x1xf32> to vector<24x1xf32>
    %c0_31 = arith.constant 0 : index
    %c0_32 = arith.constant 0 : index
    %26 = vector.load %arg2[%c0_31, %c0_32] : memref<2x256xf32, #tpu.memory_space<vmem>>, vector<1x256xf32>
    %c1_33 = arith.constant 1 : index
    %c0_34 = arith.constant 0 : index
    %27 = vector.load %arg2[%c1_33, %c0_34] : memref<2x256xf32, #tpu.memory_space<vmem>>, vector<1x256xf32>
    %c0_35 = arith.constant 0 : index
    %c0_36 = arith.constant 0 : index
    %c0_37 = arith.constant 0 : index
    %28 = vector.load %arg1[%c0_35, %c0_36, %c0_37] : memref<1x4x256xf32, #tpu.memory_space<vmem>>, vector<1x4x256xf32>
    %29 = vector.shape_cast %28 : vector<1x4x256xf32> to vector<4x256xf32>
    %cst_38 = arith.constant dense<0.000000e+00> : vector<24x256xf32>
    %30 = tpu.matmul %3, %29, %cst_38 {dimension_numbers = #tpu.dot_dimension_numbers<[1], [0], [0], [1], [0, 0, 1, 1], [], []>} : vector<24x4xf32>, vector<4x256xf32>, vector<24x256xf32> -> vector<24x256xf32>
    %31 = vector.broadcast %5 : vector<24x1xf32> to vector<24x256xf32>
    %32 = arith.addf %30, %31 : vector<24x256xf32>
    %cst_39 = arith.constant 0.000000e+00 : f32
    %cst_40 = arith.constant 6.000000e+00 : f32
    %33 = vector.broadcast %cst_39 : f32 to vector<24x256xf32>
    %34 = arith.maximumf %33, %32 : vector<24x256xf32>
    %35 = vector.broadcast %cst_40 : f32 to vector<24x256xf32>
    %36 = arith.minimumf %35, %34 : vector<24x256xf32>
    %c0_41 = arith.constant 0 : index
    %c128 = arith.constant 128 : index
    %37 = vector.load %arg10[%c0_41, %c128] : memref<24x512xf32, #tpu.memory_space<vmem>>, vector<24x256xf32>
    tpu.vector_store %arg10[%c0_41, %c128], %36 {strides = array<i32>} : memref<24x512xf32, #tpu.memory_space<vmem>>, vector<24x256xf32>,
    %38 = vector.broadcast %17 : vector<24x1xf32> to vector<24x256xf32>
    %39 = arith.mulf %36, %38 : vector<24x256xf32>
    %c0_42 = arith.constant 0 : index
    %c112 = arith.constant 112 : index
    %40 = vector.load %arg10[%c0_42, %c112] : memref<24x512xf32, #tpu.memory_space<vmem>>, vector<24x256xf32>
    %41 = vector.broadcast %11 : vector<24x1xf32> to vector<24x256xf32>
    %42 = arith.mulf %40, %41 : vector<24x256xf32>
    %43 = arith.addf %39, %42 : vector<24x256xf32>
    %c0_43 = arith.constant 0 : index
    %c144 = arith.constant 144 : index
    %44 = vector.load %arg10[%c0_43, %c144] : memref<24x512xf32, #tpu.memory_space<vmem>>, vector<24x256xf32>
    %45 = vector.broadcast %23 : vector<24x1xf32> to vector<24x256xf32>
    %46 = arith.mulf %44, %45 : vector<24x256xf32>
    %47 = arith.addf %43, %46 : vector<24x256xf32>
    %48 = vector.broadcast %7 : vector<24x1xf32> to vector<24x256xf32>
    %49 = arith.addf %47, %48 : vector<24x256xf32>
    %c0_44 = arith.constant 0 : index
    %c111 = arith.constant 111 : index
    %50 = vector.load %arg10[%c0_44, %c111] : memref<24x512xf32, #tpu.memory_space<vmem>>, vector<24x256xf32>
    %51 = vector.broadcast %9 : vector<24x1xf32> to vector<24x256xf32>
    %52 = arith.mulf %50, %51 : vector<24x256xf32>
    %c0_45 = arith.constant 0 : index
    %c127 = arith.constant 127 : index
    %53 = vector.load %arg10[%c0_45, %c127] : memref<24x512xf32, #tpu.memory_space<vmem>>, vector<24x256xf32>
    %54 = vector.broadcast %15 : vector<24x1xf32> to vector<24x256xf32>
    %55 = arith.mulf %53, %54 : vector<24x256xf32>
    %56 = arith.addf %52, %55 : vector<24x256xf32>
    %c0_46 = arith.constant 0 : index
    %c143 = arith.constant 143 : index
    %57 = vector.load %arg10[%c0_46, %c143] : memref<24x512xf32, #tpu.memory_space<vmem>>, vector<24x256xf32>
    %58 = vector.broadcast %21 : vector<24x1xf32> to vector<24x256xf32>
    %59 = arith.mulf %57, %58 : vector<24x256xf32>
    %60 = arith.addf %56, %59 : vector<24x256xf32>
    %c0_47 = arith.constant 0 : index
    %c113 = arith.constant 113 : index
    %61 = vector.load %arg10[%c0_47, %c113] : memref<24x512xf32, #tpu.memory_space<vmem>>, vector<24x256xf32>
    %62 = vector.broadcast %13 : vector<24x1xf32> to vector<24x256xf32>
    %63 = arith.mulf %61, %62 : vector<24x256xf32>
    %c0_48 = arith.constant 0 : index
    %c129 = arith.constant 129 : index
    %64 = vector.load %arg10[%c0_48, %c129] : memref<24x512xf32, #tpu.memory_space<vmem>>, vector<24x256xf32>
    %65 = vector.broadcast %19 : vector<24x1xf32> to vector<24x256xf32>
    %66 = arith.mulf %64, %65 : vector<24x256xf32>
    %67 = arith.addf %63, %66 : vector<24x256xf32>
    %c0_49 = arith.constant 0 : index
    %c145 = arith.constant 145 : index
    %68 = vector.load %arg10[%c0_49, %c145] : memref<24x512xf32, #tpu.memory_space<vmem>>, vector<24x256xf32>
    %69 = vector.broadcast %25 : vector<24x1xf32> to vector<24x256xf32>
    %70 = arith.mulf %68, %69 : vector<24x256xf32>
    %71 = arith.addf %67, %70 : vector<24x256xf32>
    %72 = vector.broadcast %26 : vector<1x256xf32> to vector<24x256xf32>
    %73 = arith.mulf %72, %60 : vector<24x256xf32>
    %74 = arith.addf %49, %73 : vector<24x256xf32>
    %75 = vector.broadcast %27 : vector<1x256xf32> to vector<24x256xf32>
    %76 = arith.mulf %75, %71 : vector<24x256xf32>
    %77 = arith.addf %74, %76 : vector<24x256xf32>
    %cst_50 = arith.constant 0.000000e+00 : f32
    %cst_51 = arith.constant 6.000000e+00 : f32
    %78 = vector.broadcast %cst_50 : f32 to vector<24x256xf32>
    %79 = arith.maximumf %78, %77 : vector<24x256xf32>
    %80 = vector.broadcast %cst_51 : f32 to vector<24x256xf32>
    %81 = arith.minimumf %80, %79 : vector<24x256xf32>
    %cst_52 = arith.constant dense<0.000000e+00> : vector<4x256xf32>
    %82 = tpu.matmul %4, %81, %cst_52 {dimension_numbers = #tpu.dot_dimension_numbers<[1], [0], [0], [1], [0, 0, 1, 1], [], []>} : vector<4x24xf32>, vector<24x256xf32>, vector<4x256xf32> -> vector<4x256xf32>
    %83 = vector.broadcast %6 : vector<4x1xf32> to vector<4x256xf32>
    %84 = arith.addf %82, %83 : vector<4x256xf32>
    %c0_53 = arith.constant 0 : index
    %c0_54 = arith.constant 0 : index
    %c0_55 = arith.constant 0 : index
    %85 = vector.load %arg1[%c0_53, %c0_54, %c0_55] : memref<1x4x256xf32, #tpu.memory_space<vmem>>, vector<1x4x256xf32>
    %86 = vector.shape_cast %85 : vector<1x4x256xf32> to vector<4x256xf32>
    %87 = arith.addf %84, %86 : vector<4x256xf32>
    %c0_56 = arith.constant 0 : index
    %c0_57 = arith.constant 0 : index
    %c0_58 = arith.constant 0 : index
    %88 = vector.load %arg9[%c0_56, %c0_57, %c0_58] : memref<1x4x256xf32, #tpu.memory_space<vmem>>, vector<1x4x256xf32>
    %89 = vector.shape_cast %88 : vector<1x4x256xf32> to vector<4x256xf32>
    %90 = vector.shape_cast %87 : vector<4x256xf32> to vector<1x4x256xf32>
    tpu.vector_store %arg9[%c0_56, %c0_57, %c0_58], %90 {strides = array<i32>} : memref<1x4x256xf32, #tpu.memory_space<vmem>>, vector<1x4x256xf32>,
    return
  }
  func.func @transform_0(%arg0: i32) -> (i32, i32, i32) {
    %c0_i32 = arith.constant 0 : i32
    %c0_i32_0 = arith.constant 0 : i32
    %c0_i32_1 = arith.constant 0 : i32
    return %arg0, %c0_i32, %c0_i32_0 : i32, i32, i32
  }
  func.func @transform_1(%arg0: i32) -> (i32, i32) {
    %c0_i32 = arith.constant 0 : i32
    %c0_i32_0 = arith.constant 0 : i32
    %c0_i32_1 = arith.constant 0 : i32
    return %c0_i32, %c0_i32_0 : i32, i32
  }
  func.func @transform_2(%arg0: i32) -> (i32, i32) {
    %c0_i32 = arith.constant 0 : i32
    %c0_i32_0 = arith.constant 0 : i32
    %c0_i32_1 = arith.constant 0 : i32
    return %c0_i32, %c0_i32_0 : i32, i32
  }
  func.func @transform_3(%arg0: i32) -> (i32, i32) {
    %c0_i32 = arith.constant 0 : i32
    %c0_i32_0 = arith.constant 0 : i32
    %c0_i32_1 = arith.constant 0 : i32
    return %c0_i32, %c0_i32_0 : i32, i32
  }
  func.func @transform_4(%arg0: i32) -> (i32, i32, i32) {
    %c0_i32 = arith.constant 0 : i32
    %c0_i32_0 = arith.constant 0 : i32
    %c0_i32_1 = arith.constant 0 : i32
    %c0_i32_2 = arith.constant 0 : i32
    return %c0_i32, %c0_i32_0, %c0_i32_1 : i32, i32, i32
  }
  func.func @transform_5(%arg0: i32) -> (i32, i32) {
    %c0_i32 = arith.constant 0 : i32
    %c0_i32_0 = arith.constant 0 : i32
    %c0_i32_1 = arith.constant 0 : i32
    return %c0_i32, %c0_i32_0 : i32, i32
  }
  func.func @transform_6(%arg0: i32) -> (i32, i32) {
    %c0_i32 = arith.constant 0 : i32
    %c0_i32_0 = arith.constant 0 : i32
    %c0_i32_1 = arith.constant 0 : i32
    return %c0_i32, %c0_i32_0 : i32, i32
  }
  func.func @transform_7(%arg0: i32) -> (i32, i32) {
    %c0_i32 = arith.constant 0 : i32
    %c0_i32_0 = arith.constant 0 : i32
    %c0_i32_1 = arith.constant 0 : i32
    return %c0_i32, %c0_i32_0 : i32, i32
  }
  func.func @transform_8(%arg0: i32) -> (i32, i32, i32) {
    %c0_i32 = arith.constant 0 : i32
    %c0_i32_0 = arith.constant 0 : i32
    %c0_i32_1 = arith.constant 0 : i32
    return %arg0, %c0_i32, %c0_i32_0 : i32, i32, i32
  }
}

</mosaic_0001>

<llo_original>
// kernel: tpu_custom_call.1
$region0: #{tpu_custom_call.1}
  #allocation0 [shape = 'u32[]', space=smem, size = 0x4, offset = 0x4, fixed_abs, tag = 'smem constant byte address 0x4 - core index']
  #allocation1 [shape = 'u32[144,128]{1,0:T(1,128)}', space=vmem, size = 0x12000, scoped, tag = 'internal scratch']
  #allocation2 [shape = 'f32[24,512]{1,0:T(8,128)}', space=vmem, size = 0xc000, scoped, tag = 'scratch operand']
  %s0 = inlined_call_operand.vmem [shape: f32[2,4,256], index: 0, kind: input, shape index: {}]
  %s1 = inlined_call_operand.vmem [shape: f32[2,256], index: 1, kind: input, shape index: {}]
  %s2 = inlined_call_operand.vmem [shape: f32[24,4], index: 2, kind: input, shape index: {}]
  %s3 = inlined_call_operand.vmem [shape: f32[24,1], index: 3, kind: input, shape index: {}]
  %s4 = inlined_call_operand.vmem [shape: f32[9,24,1], index: 4, kind: input, shape index: {}]
  %s5 = inlined_call_operand.vmem [shape: f32[24,1], index: 5, kind: input, shape index: {}]
  %s6 = inlined_call_operand.vmem [shape: f32[4,24], index: 6, kind: input, shape index: {}]
  %s7 = inlined_call_operand.vmem [shape: f32[4,1], index: 7, kind: input, shape index: {}]
  %s8 = inlined_call_operand.hbm [shape: f32[2,4,256], index: 8, kind: output, shape index: {}]
  %s9 = sld [smem:[#allocation0]]
  $region65: #{tpu_custom_call.1} parent=0
    _
  %s11 = ssub.s32 1, %s9
  %s12 = scalar_select 0, %s11, %s9
  $region1: #{tpu_custom_call.1} parent=0
    #allocation3 [shape = 'u8[8192]{0}', space=vmem, size = 0x2000, scoped, tag = 'output window, operand 0']
    #allocation4 [shape = 's32[2]{0}', space=sflag, size = 0x8, scoped, tag = 'scoped memory for tpu_custom_call.1']
    %13 = vsyncpa [#allocation4], 0
    %s14 = scalar_lea.sflag [#allocation4], 1
    %15 = vsyncpa %s14, 0
    loop: start=0, step=1, limit=4
    $region2: #{tpu_custom_call.1} parent=1 // loop_pre_header
      _
    $region3: #{tpu_custom_call.1} parent=1 // loop_header
      %s17 = sphi 0, %s21
      %p18 = scmp.ge.s32.totalorder %s17, 4
      %s27 = sphi 0, %s29
      %s30 = sphi 0, %s27
      %s31 = sphi 0, %s30
      %s47 = sphi 0, %s31
      %s51 = sphi 0, %s51
      %s53 = sphi 0, %s51
      %s54 = sphi 0, %s53
      %s68 = sphi 0, %s54
      %s72 = sphi 0, %s72
      %s74 = sphi 0, %s72
      %s75 = sphi 0, %s74
      %s89 = sphi 0, %s75
      %s93 = sphi 0, %s93
      %s95 = sphi 0, %s93
      %s96 = sphi 0, %s95
      %s110 = sphi 0, %s96
      %s114 = sphi 0, %s114
      %s116 = sphi 0, %s114
      %s117 = sphi 0, %s116
      %s131 = sphi 0, %s117
      %s135 = sphi 0, %s135
      %s137 = sphi 0, %s135
      %s138 = sphi 0, %s137
      %s152 = sphi 0, %s138
      %s156 = sphi 0, %s156
      %s158 = sphi 0, %s156
      %s159 = sphi 0, %s158
      %s173 = sphi 0, %s159
      %s177 = sphi 0, %s177
      %s179 = sphi 0, %s177
      %s180 = sphi 0, %s179
      %s194 = sphi 0, %s180
      %s200 = sphi 0, %s202
      %s203 = sphi 0, %s200
      %s204 = sphi 0, %s203
      %s220 = sphi 0, %s204
    $region4: #{tpu_custom_call.1} parent=1 // loop_header_branch
      %20 = sbr.rel (%p18) target = $region8
    $region5: #{tpu_custom_call.1} parent=1 // loop_body
      %s22 = ssub.s32 %s17, 1
      %s23 = ssub.s32 %s17, 2
      %s24 = sadd.s32 %s17, 1
      %s25 = ssub.s32 %s17, %s24
      %p26 = scmp.eq.s32.totalorder %s25, 0
      %s28 = sadd.s32 %s27, 1
      %s29 = scalar_select %p26, %s27, %s28
      %p32 = pneg %p26
      %p33 = scmp.eq.s32.totalorder %s17, 1
      %p34 = por %p32, %p33
      %p35 = scmp.ne.s32.totalorder %s27, %s30
      %p36 = scmp.eq.s32.totalorder %s17, 0
      %p37 = por %p35, %p36
      %p38 = scmp.ne.s32.totalorder %s27, %s30
      %p39 = scmp.eq.s32.totalorder %s22, 1
      %p40 = por %p38, %p39
      %p41 = scmp.ne.s32.totalorder %s30, %s31
      %p42 = scmp.eq.s32.totalorder %s22, 0
      %p43 = por %p41, %p42
      %p44 = scmp.ne.s32.totalorder %s30, %s31
      %p45 = scmp.eq.s32.totalorder %s23, 1
      %p46 = por %p44, %p45
      %p48 = scmp.ne.s32.totalorder %s31, %s47
      %p49 = scmp.eq.s32.totalorder %s23, 0
      %p50 = por %p48, %p49
      %s52 = sadd.s32 %s51, 1
      %p55 = scmp.eq.s32.totalorder %s17, 1
      %p56 = scmp.ne.s32.totalorder %s51, %s53
      %p57 = scmp.eq.s32.totalorder %s17, 0
      %p58 = por %p56, %p57
      %p59 = scmp.ne.s32.totalorder %s51, %s53
      %p60 = scmp.eq.s32.totalorder %s22, 1
      %p61 = por %p59, %p60
      %p62 = scmp.ne.s32.totalorder %s53, %s54
      %p63 = scmp.eq.s32.totalorder %s22, 0
      %p64 = por %p62, %p63
      %p65 = scmp.ne.s32.totalorder %s53, %s54
      %p66 = scmp.eq.s32.totalorder %s23, 1
      %p67 = por %p65, %p66
      %p69 = scmp.ne.s32.totalorder %s54, %s68
      %p70 = scmp.eq.s32.totalorder %s23, 0
      %p71 = por %p69, %p70
      %s73 = sadd.s32 %s72, 1
      %p76 = scmp.eq.s32.totalorder %s17, 1
      %p77 = scmp.ne.s32.totalorder %s72, %s74
      %p78 = scmp.eq.s32.totalorder %s17, 0
      %p79 = por %p77, %p78
      %p80 = scmp.ne.s32.totalorder %s72, %s74
      %p81 = scmp.eq.s32.totalorder %s22, 1
      %p82 = por %p80, %p81
      %p83 = scmp.ne.s32.totalorder %s74, %s75
      %p84 = scmp.eq.s32.totalorder %s22, 0
      %p85 = por %p83, %p84
      %p86 = scmp.ne.s32.totalorder %s74, %s75
      %p87 = scmp.eq.s32.totalorder %s23, 1
      %p88 = por %p86, %p87
      %p90 = scmp.ne.s32.totalorder %s75, %s89
      %p91 = scmp.eq.s32.totalorder %s23, 0
      %p92 = por %p90, %p91
      %s94 = sadd.s32 %s93, 1
      %p97 = scmp.eq.s32.totalorder %s17, 1
      %p98 = scmp.ne.s32.totalorder %s93, %s95
      %p99 = scmp.eq.s32.totalorder %s17, 0
      %p100 = por %p98, %p99
      %p101 = scmp.ne.s32.totalorder %s93, %s95
      %p102 = scmp.eq.s32.totalorder %s22, 1
      %p103 = por %p101, %p102
      %p104 = scmp.ne.s32.totalorder %s95, %s96
      %p105 = scmp.eq.s32.totalorder %s22, 0
      %p106 = por %p104, %p105
      %p107 = scmp.ne.s32.totalorder %s95, %s96
      %p108 = scmp.eq.s32.totalorder %s23, 1
      %p109 = por %p107, %p108
      %p111 = scmp.ne.s32.totalorder %s96, %s110
      %p112 = scmp.eq.s32.totalorder %s23, 0
      %p113 = por %p111, %p112
      %s115 = sadd.s32 %s114, 1
      %p118 = scmp.eq.s32.totalorder %s17, 1
      %p119 = scmp.ne.s32.totalorder %s114, %s116
      %p120 = scmp.eq.s32.totalorder %s17, 0
      %p121 = por %p119, %p120
      %p122 = scmp.ne.s32.totalorder %s114, %s116
      %p123 = scmp.eq.s32.totalorder %s22, 1
      %p124 = por %p122, %p123
      %p125 = scmp.ne.s32.totalorder %s116, %s117
      %p126 = scmp.eq.s32.totalorder %s22, 0
      %p127 = por %p125, %p126
      %p128 = scmp.ne.s32.totalorder %s116, %s117
      %p129 = scmp.eq.s32.totalorder %s23, 1
      %p130 = por %p128, %p129
      %p132 = scmp.ne.s32.totalorder %s117, %s131
      %p133 = scmp.eq.s32.totalorder %s23, 0
      %p134 = por %p132, %p133
      %s136 = sadd.s32 %s135, 1
      %p139 = scmp.eq.s32.totalorder %s17, 1
      %p140 = scmp.ne.s32.totalorder %s135, %s137
      %p141 = scmp.eq.s32.totalorder %s17, 0
      %p142 = por %p140, %p141
      %p143 = scmp.ne.s32.totalorder %s135, %s137
      %p144 = scmp.eq.s32.totalorder %s22, 1
      %p145 = por %p143, %p144
      %p146 = scmp.ne.s32.totalorder %s137, %s138
      %p147 = scmp.eq.s32.totalorder %s22, 0
      %p148 = por %p146, %p147
      %p149 = scmp.ne.s32.totalorder %s137, %s138
      %p150 = scmp.eq.s32.totalorder %s23, 1
      %p151 = por %p149, %p150
      %p153 = scmp.ne.s32.totalorder %s138, %s152
      %p154 = scmp.eq.s32.totalorder %s23, 0
      %p155 = por %p153, %p154
      %s157 = sadd.s32 %s156, 1
      %p160 = scmp.eq.s32.totalorder %s17, 1
      %p161 = scmp.ne.s32.totalorder %s156, %s158
      %p162 = scmp.eq.s32.totalorder %s17, 0
      %p163 = por %p161, %p162
      %p164 = scmp.ne.s32.totalorder %s156, %s158
      %p165 = scmp.eq.s32.totalorder %s22, 1
      %p166 = por %p164, %p165
      %p167 = scmp.ne.s32.totalorder %s158, %s159
      %p168 = scmp.eq.s32.totalorder %s22, 0
      %p169 = por %p167, %p168
      %p170 = scmp.ne.s32.totalorder %s158, %s159
      %p171 = scmp.eq.s32.totalorder %s23, 1
      %p172 = por %p170, %p171
      %p174 = scmp.ne.s32.totalorder %s159, %s173
      %p175 = scmp.eq.s32.totalorder %s23, 0
      %p176 = por %p174, %p175
      %s178 = sadd.s32 %s177, 1
      %p181 = scmp.eq.s32.totalorder %s17, 1
      %p182 = scmp.ne.s32.totalorder %s177, %s179
      %p183 = scmp.eq.s32.totalorder %s17, 0
      %p184 = por %p182, %p183
      %p185 = scmp.ne.s32.totalorder %s177, %s179
      %p186 = scmp.eq.s32.totalorder %s22, 1
      %p187 = por %p185, %p186
      %p188 = scmp.ne.s32.totalorder %s179, %s180
      %p189 = scmp.eq.s32.totalorder %s22, 0
      %p190 = por %p188, %p189
      %p191 = scmp.ne.s32.totalorder %s179, %s180
      %p192 = scmp.eq.s32.totalorder %s23, 1
      %p193 = por %p191, %p192
      %p195 = scmp.ne.s32.totalorder %s180, %s194
      %p196 = scmp.eq.s32.totalorder %s23, 0
      %p197 = por %p195, %p196
      %s198 = ssub.s32 %s17, %s24
      %p199 = scmp.eq.s32.totalorder %s198, 0
      %s201 = sadd.s32 %s200, 1
      %s202 = scalar_select %p199, %s200, %s201
      %p205 = pneg %p199
      %p206 = scmp.eq.s32.totalorder %s17, 1
      %p207 = por %p205, %p206
      %p208 = scmp.ne.s32.totalorder %s200, %s203
      %p209 = scmp.eq.s32.totalorder %s17, 0
      %p210 = por %p208, %p209
      %p211 = scmp.ne.s32.totalorder %s200, %s203
      %p212 = scmp.eq.s32.totalorder %s22, 1
      %p213 = por %p211, %p212
      %p214 = scmp.ne.s32.totalorder %s203, %s204
      %p215 = scmp.eq.s32.totalorder %s22, 0
      %p216 = por %p214, %p215
      %p217 = scmp.ne.s32.totalorder %s203, %s204
      %p218 = scmp.eq.s32.totalorder %s23, 1
      %p219 = por %p217, %p218
      %p221 = scmp.ne.s32.totalorder %s204, %s220
      %p222 = scmp.eq.s32.totalorder %s23, 0
      %p223 = por %p221, %p222
      %p224 = scmp.le.s32.totalorder 1, %s17
      %p225 = scmp.lt.s32.totalorder %s17, 3
      %p226 = pnand %p224, %p225
      %p227 = pneg %p226
      // Predicated region
      $region9: #{tpu_custom_call.1} parent=5 // pred_check
        _
      $region10: #{tpu_custom_call.1} parent=5 // pred_check_branch
        %229 = sbr.rel (%p226) target = $region12
      $region11: #{tpu_custom_call.1} parent=5 // pred_region
        %s230 = ssub.s32 %s17, 1
        // Predicated region
        $region13: #{tpu_custom_call.1} parent=11 // pred_check
          %p231 = pneg %p64
        $region14: #{tpu_custom_call.1} parent=11 // pred_check_branch
          %233 = sbr.rel (%p231) target = $region16
        $region15: #{tpu_custom_call.1} parent=11 // pred_region
          _
        $region16: #{tpu_custom_call.1} parent=11 // pred_fallthru
          _
        // Predicated region
        $region17: #{tpu_custom_call.1} parent=11 // pred_check
          %p234 = pneg %p85
        $region18: #{tpu_custom_call.1} parent=11 // pred_check_branch
          %236 = sbr.rel (%p234) target = $region20
        $region19: #{tpu_custom_call.1} parent=11 // pred_region
          _
        $region20: #{tpu_custom_call.1} parent=11 // pred_fallthru
          _
        // Predicated region
        $region21: #{tpu_custom_call.1} parent=11 // pred_check
          %p237 = pneg %p106
        $region22: #{tpu_custom_call.1} parent=11 // pred_check_branch
          %239 = sbr.rel (%p237) target = $region24
        $region23: #{tpu_custom_call.1} parent=11 // pred_region
          _
        $region24: #{tpu_custom_call.1} parent=11 // pred_fallthru
          _
        // Predicated region
        $region25: #{tpu_custom_call.1} parent=11 // pred_check
          %p240 = pneg %p127
        $region26: #{tpu_custom_call.1} parent=11 // pred_check_branch
          %242 = sbr.rel (%p240) target = $region28
        $region27: #{tpu_custom_call.1} parent=11 // pred_region
          _
        $region28: #{tpu_custom_call.1} parent=11 // pred_fallthru
          _
        // Predicated region
        $region29: #{tpu_custom_call.1} parent=11 // pred_check
          %p243 = pneg %p148
        $region30: #{tpu_custom_call.1} parent=11 // pred_check_branch
          %245 = sbr.rel (%p243) target = $region32
        $region31: #{tpu_custom_call.1} parent=11 // pred_region
          _
        $region32: #{tpu_custom_call.1} parent=11 // pred_fallthru
          _
        // Predicated region
        $region33: #{tpu_custom_call.1} parent=11 // pred_check
          %p246 = pneg %p169
        $region34: #{tpu_custom_call.1} parent=11 // pred_check_branch
          %248 = sbr.rel (%p246) target = $region36
        $region35: #{tpu_custom_call.1} parent=11 // pred_region
          _
        $region36: #{tpu_custom_call.1} parent=11 // pred_fallthru
          _
        // Predicated region
        $region37: #{tpu_custom_call.1} parent=11 // pred_check
          %p249 = pneg %p190
        $region38: #{tpu_custom_call.1} parent=11 // pred_check_branch
          %251 = sbr.rel (%p249) target = $region40
        $region39: #{tpu_custom_call.1} parent=11 // pred_region
          _
        $region40: #{tpu_custom_call.1} parent=11 // pred_fallthru
          _
      $region12: #{tpu_custom_call.1} parent=5 // pred_fallthru
        _
      %p252 = scmp.lt.s32.totalorder %s17, 2
      // Predicated region
      $region41: #{tpu_custom_call.1} parent=5 // pred_check
        %p253 = pneg %p252
      $region42: #{tpu_custom_call.1} parent=5 // pred_check_branch
        %255 = sbr.rel (%p253) target = $region44
      $region43: #{tpu_custom_call.1} parent=5 // pred_region
        // Predicated region
        $region45: #{tpu_custom_call.1} parent=43 // pred_check
          %p256 = pneg %p37
        $region46: #{tpu_custom_call.1} parent=43 // pred_check_branch
          %258 = sbr.rel (%p256) target = $region48
        $region47: #{tpu_custom_call.1} parent=43 // pred_region
          %p259 = scmp.lt.s32.totalorder %s17, 1
          %s260 = scalar_select %p259, %s17, 1
          %s261 = smul.addr %s260, 2
          %s262 = smul.addr %s261, 4
          %s263 = scalar_lea.vmem %s0, %s262
        $region48: #{tpu_custom_call.1} parent=43 // pred_fallthru
          _
      $region44: #{tpu_custom_call.1} parent=5 // pred_fallthru
        _
      %p264 = scmp.le.s32.totalorder 1, %s17
      %p265 = scmp.lt.s32.totalorder %s17, 3
      %p266 = pnand %p264, %p265
      %p267 = pneg %p266
      // Predicated region
      $region49: #{tpu_custom_call.1} parent=5 // pred_check
        _
      $region50: #{tpu_custom_call.1} parent=5 // pred_check_branch
        %269 = sbr.rel (%p266) target = $region52
      $region51: #{tpu_custom_call.1} parent=5 // pred_region
        %s270 = ssub.s32 %s17, 1
        %p271 = scmp.lt.s32.totalorder %s22, 1
        %s272 = scalar_select %p271, %s22, 1
        %s273 = smul.addr %s272, 2
        %s274 = smul.addr %s273, 4
        %s275 = scalar_lea.vmem %s0, %s274
        %p276 = pneg %p43
        %p277 = pneg %p40
        %p278 = pneg %p64
        %p279 = pneg %p61
        %p280 = pneg %p85
        %p281 = pneg %p82
        %p282 = pneg %p106
        %p283 = pneg %p103
        %p284 = pneg %p127
        %p285 = pneg %p124
        %p286 = pneg %p148
        %p287 = pneg %p145
        %p288 = pneg %p169
        %p289 = pneg %p166
        %p290 = pneg %p190
        %p291 = pneg %p187
        %p292 = pneg %p216
        %p293 = pneg %p213
        %s294 = sand.u32 %s203, 1
        %s295 = scalar_lea.sflag [#allocation4], %s294
        %s296 = sand.u32 %s203, 1
        %s297 = smul.addr %s296, 8
        %s298 = scalar_lea.vmem [#allocation3], %s297
        %p299 = scmp.lt.s32.totalorder %s22, 1
        %s300 = scalar_select %p299, %s22, 1
        %s301 = smul.addr %s300, 2
        %s302 = smul.addr %s301, 4
        %s303 = scalar_lea.vmem %s0, %s302
        %304 = vst [vmem:[#allocation2] sm:$0xff] 0.0
        %305 = vst [vmem:[#allocation2 + $0x20] sm:$0xff] 0.0
        %306 = vst [vmem:[#allocation2 + $0x40] sm:$0xff] 0.0
        %307 = vst [vmem:[#allocation2 + $0x18] sm:$0xff] 0.0
        %308 = vst [vmem:[#allocation2 + $0x38] sm:$0xff] 0.0
        %309 = vst [vmem:[#allocation2 + $0x58] sm:$0xff] 0.0
        %v310 = vld [vmem:[%s2] sm:$0xff]
        %v311 = vld [vmem:[%s2 + $0x8] sm:$0xff]
        %v312 = vld [vmem:[%s2 + $0x10] sm:$0xff]
        %v313 = vld [vmem:[%s6] sm:$0xf]
        %v314 = vld [vmem:[%s3] sm:$0xff]
        %v315 = vld [vmem:[%s3 + $0x8] sm:$0xff]
        %v316 = vld [vmem:[%s3 + $0x10] sm:$0xff]
        %v317 = vld [vmem:[%s7] sm:$0xf]
        %v318 = vld [vmem:[%s5] sm:$0xff]
        %v319 = vld [vmem:[%s5 + $0x8] sm:$0xff]
        %v320 = vld [vmem:[%s5 + $0x10] sm:$0xff]
        %v321 = vld [vmem:[%s4] sm:$0xff]
        %v322 = vld [vmem:[%s4 + $0x8] sm:$0xff]
        %v323 = vld [vmem:[%s4 + $0x10] sm:$0xff]
        %s324 = scalar_lea.vmem %s4, 24
        %v325 = vld [vmem:[%s324] sm:$0xff]
        %v326 = vld [vmem:[%s324 + $0x8] sm:$0xff]
        %v327 = vld [vmem:[%s324 + $0x10] sm:$0xff]
        %s328 = scalar_lea.vmem %s4, 48
        %v329 = vld [vmem:[%s328] sm:$0xff]
        %v330 = vld [vmem:[%s328 + $0x8] sm:$0xff]
        %v331 = vld [vmem:[%s328 + $0x10] sm:$0xff]
        %s332 = scalar_lea.vmem %s4, 72
        %v333 = vld [vmem:[%s332] sm:$0xff]
        %v334 = vld [vmem:[%s332 + $0x8] sm:$0xff]
        %v335 = vld [vmem:[%s332 + $0x10] sm:$0xff]
        %s336 = scalar_lea.vmem %s4, 96
        %v337 = vld [vmem:[%s336] sm:$0xff]
        %v338 = vld [vmem:[%s336 + $0x8] sm:$0xff]
        %v339 = vld [vmem:[%s336 + $0x10] sm:$0xff]
        %s340 = scalar_lea.vmem %s4, 120
        %v341 = vld [vmem:[%s340] sm:$0xff]
        %v342 = vld [vmem:[%s340 + $0x8] sm:$0xff]
        %v343 = vld [vmem:[%s340 + $0x10] sm:$0xff]
        %s344 = scalar_lea.vmem %s4, 144
        %v345 = vld [vmem:[%s344] sm:$0xff]
        %v346 = vld [vmem:[%s344 + $0x8] sm:$0xff]
        %v347 = vld [vmem:[%s344 + $0x10] sm:$0xff]
        %s348 = scalar_lea.vmem %s4, 168
        %v349 = vld [vmem:[%s348] sm:$0xff]
        %v350 = vld [vmem:[%s348 + $0x8] sm:$0xff]
        %v351 = vld [vmem:[%s348 + $0x10] sm:$0xff]
        %s352 = scalar_lea.vmem %s4, 192
        %v353 = vld [vmem:[%s352] sm:$0xff]
        %v354 = vld [vmem:[%s352 + $0x8] sm:$0xff]
        %v355 = vld [vmem:[%s352 + $0x10] sm:$0xff]
        %v356 = vld [vmem:[%s1] ss:$2 sm:$0x3]
        %s357 = scalar_lea.vmem %s1, 1
        %v358 = vld [vmem:[%s357] ss:$2 sm:$0x3]
        %v359 = vld [vmem:[%s303] sm:$0xff]
        %361 = vset.pattern.permute.xlu0 0
        %362 = vperm.xlu0 %361, %v314
        %v363 = vpop.permute.xlu0 %362
        %366 = vset.pattern.permute.xlu0 0
        %367 = vperm.xlu0 %366, %v315
        %v368 = vpop.permute.xlu0 %367
        %371 = vset.pattern.permute.xlu0 0
        %372 = vperm.xlu0 %371, %v316
        %v373 = vpop.permute.xlu0 %372
        %v376 = vcombine.high %v359, %v359
        %vm377 = vcmask 31744
        %v379 = vsel %vm377, %v310, 0
        %v382 = vsel %vm377, %v311, 0
        %v385 = vsel %vm377, %v312, 0
        %vm387 = vcmask 1043456
        %v388 = vsel %vm387, %v359, 0
        %v390 = vsel %vm387, %v376, 0
        %392 = vmatprep.subr.mxu0 %v390
        %393 = vmatpush1.msra.mxu0 %v388
        %394 = vmatprep.subr.mxu0 0.0
        %395 = vmatpush1.msra.mxu0 0.0
        %396 = vmatprep.subr.mxu0 0.0
        %397 = vmatpush1.msra.mxu0 0.0
        %398 = vmatprep.subr.mxu0 0.0
        %399 = vmatpush1.msra.mxu0 0.0
        %400 = vmatprep.subr.mxu0 0.0
        %401 = vmatpush1.msra.mxu0 0.0
        %402 = vmatprep.subr.mxu0 0.0
        %403 = vmatpush1.msra.mxu0 0.0
        %404 = vmatprep.subr.mxu0 0.0
        %405 = vmatpush1.msra.mxu0 0.0
        %406 = vmatprep.subr.mxu0 0.0
        %407 = vmatpush1.msra.mxu0 0.0
        %408 = vmatprep.subr.mxu0 0.0
        %409 = vmatpush1.msra.mxu0 0.0
        %410 = vmatprep.subr.mxu0 0.0
        %411 = vmatpush1.msra.mxu0 0.0
        %412 = vmatprep.subr.mxu0 0.0
        %413 = vmatpush1.msra.mxu0 0.0
        %414 = vmatprep.subr.mxu0 0.0
        %415 = vmatpush1.msra.mxu0 0.0
        %416 = vmatprep.subr.mxu0 0.0
        %417 = vmatpush1.msra.mxu0 0.0
        %418 = vmatprep.subr.mxu0 0.0
        %419 = vmatpush1.msra.mxu0 0.0
        %420 = vmatprep.subr.mxu0 0.0
        %421 = vmatpush1.msra.mxu0 0.0
        %422 = vmatprep.subr.mxu0 0.0
        %423 = vmatpush1.msra.mxu0 0.0
        %424 = vmatprep.subr.mxu0 0.0
        %425 = vmatpush1.msra.mxu0 0.0
        %426 = vmatprep.subr.mxu0 0.0
        %427 = vmatpush1.msra.mxu0 0.0
        %428 = vmatprep.subr.mxu0 0.0
        %429 = vmatpush1.msra.mxu0 0.0
        %430 = vmatprep.subr.mxu0 0.0
        %431 = vmatpush1.msra.mxu0 0.0
        %432 = vmatprep.subr.mxu0 0.0
        %433 = vmatpush1.msra.mxu0 0.0
        %434 = vmatprep.subr.mxu0 0.0
        %435 = vmatpush1.msra.mxu0 0.0
        %436 = vmatprep.subr.mxu0 0.0
        %437 = vmatpush1.msra.mxu0 0.0
        %438 = vmatprep.subr.mxu0 0.0
        %439 = vmatpush1.msra.mxu0 0.0
        %440 = vmatprep.subr.mxu0 0.0
        %441 = vmatpush1.msra.mxu0 0.0
        %442 = vmatprep.subr.mxu0 0.0
        %443 = vmatpush1.msra.mxu0 0.0
        %444 = vmatprep.subr.mxu0 0.0
        %445 = vmatpush1.msra.mxu0 0.0
        %446 = vmatprep.subr.mxu0 0.0
        %447 = vmatpush1.msra.mxu0 0.0
        %448 = vmatprep.subr.mxu0 0.0
        %449 = vmatpush1.msra.mxu0 0.0
        %450 = vmatprep.subr.mxu0 0.0
        %451 = vmatpush1.msra.mxu0 0.0
        %452 = vmatprep.subr.mxu0 0.0
        %453 = vmatpush1.msra.mxu0 0.0
        %454 = vmatprep.subr.mxu0 0.0
        %455 = vmatpush1.msra.mxu0 0.0
        %456 = vmatprep.mubr.f32.mxu0 0.0
        %457 = vmatmul.mubr.f32.gmra.mrb[0].mxu0 %v379
        %v458 = vpop.f32.mrb[0].mxu0
        %v459 = vadd.f32 %v363, %v458
        %v460 = vpop.f32.mrb[0].mxu0
        %v461 = vadd.f32 %v363, %v460
        %462 = vmatprep.mubr.f32.mxu0 0.0
        %463 = vmatmul.mubr.f32.gmra.mrb[0].mxu0 %v382
        %v464 = vpop.f32.mrb[0].mxu0
        %v465 = vadd.f32 %v368, %v464
        %v466 = vpop.f32.mrb[0].mxu0
        %v467 = vadd.f32 %v368, %v466
        %468 = vmatprep.mubr.f32.mxu0 0.0
        %469 = vmatmul.mubr.f32.gmra.mrb[0].mxu0 %v385
        %v470 = vpop.f32.mrb[0].mxu0
        %v471 = vadd.f32 %v373, %v470
        %v472 = vpop.f32.mrb[0].mxu0
        %v473 = vadd.f32 %v373, %v472
        %474 = vdwg.mxu0
        %v475 = vmax.f32 %v459, 0.0
        %v476 = vmax.f32 %v461, 0.0
        %v477 = vmax.f32 %v465, 0.0
        %v478 = vmax.f32 %v467, 0.0
        %v479 = vmax.f32 %v471, 0.0
        %v480 = vmax.f32 %v473, 0.0
        %v481 = vmin.f32 %v475, 6.0
        %v482 = vmin.f32 %v476, 6.0
        %v483 = vmin.f32 %v477, 6.0
        %v484 = vmin.f32 %v478, 6.0
        %v485 = vmin.f32 %v479, 6.0
        %v486 = vmin.f32 %v480, 6.0
        %487 = vst [vmem:[#allocation2 + $0x8] sm:$0xff] %v481
        %488 = vst [vmem:[#allocation2 + $0x10] sm:$0xff] %v482
        %489 = vst [vmem:[#allocation2 + $0x28] sm:$0xff] %v483
        %490 = vst [vmem:[#allocation2 + $0x30] sm:$0xff] %v484
        %491 = vst [vmem:[#allocation2 + $0x48] sm:$0xff] %v485
        %492 = vst [vmem:[#allocation2 + $0x50] sm:$0xff] %v486
        %494 = vset.pattern.permute.xlu0 0
        %495 = vperm.xlu0 %494, %v337
        %v496 = vpop.permute.xlu0 %495
        %499 = vset.pattern.permute.xlu0 0
        %500 = vperm.xlu0 %499, %v338
        %v501 = vpop.permute.xlu0 %500
        %504 = vset.pattern.permute.xlu0 0
        %505 = vperm.xlu0 %504, %v339
        %v506 = vpop.permute.xlu0 %505
        %v508 = vmul.f32 %v481, %v496
        %v509 = vmul.f32 %v482, %v496
        %v510 = vmul.f32 %v483, %v501
        %v511 = vmul.f32 %v484, %v501
        %v512 = vmul.f32 %v485, %v506
        %v513 = vmul.f32 %v486, %v506
        %v514 = vld [vmem:[#allocation2] sm:$0xff]
        %v515 = vld [vmem:[#allocation2 + $0x8] sm:$0xff]
        %v516 = vld [vmem:[#allocation2 + $0x10] sm:$0xff]
        %v517 = vld [vmem:[#allocation2 + $0x20] sm:$0xff]
        %v518 = vld [vmem:[#allocation2 + $0x28] sm:$0xff]
        %v519 = vld [vmem:[#allocation2 + $0x30] sm:$0xff]
        %v520 = vld [vmem:[#allocation2 + $0x40] sm:$0xff]
        %v521 = vld [vmem:[#allocation2 + $0x48] sm:$0xff]
        %v522 = vld [vmem:[#allocation2 + $0x50] sm:$0xff]
        %524 = vset.pattern.permute.xlu0 0
        %525 = vperm.xlu0 %524, %v325
        %v526 = vpop.permute.xlu0 %525
        %529 = vset.pattern.permute.xlu0 0
        %530 = vperm.xlu0 %529, %v326
        %v531 = vpop.permute.xlu0 %530
        %534 = vset.pattern.permute.xlu0 0
        %535 = vperm.xlu0 %534, %v327
        %v536 = vpop.permute.xlu0 %535
        %v538 = vmul.f32 %v514, %v526
        %v539 = vmul.f32 %v515, %v526
        %v540 = vmul.f32 %v516, %v526
        %v541 = vmul.f32 %v517, %v531
        %v542 = vmul.f32 %v518, %v531
        %v543 = vmul.f32 %v519, %v531
        %v544 = vmul.f32 %v520, %v536
        %v545 = vmul.f32 %v521, %v536
        %v546 = vmul.f32 %v522, %v536
        %556 = vrot.lane.b32.xlu0 %v538, 16
        %v557 = vpop.permute.xlu0 %556
        %558 = vrot.lane.b32.xlu0 %v539, 16
        %v559 = vpop.permute.xlu0 %558
        %560 = vrot.lane.b32.xlu0 %v540, 16
        %v561 = vpop.permute.xlu0 %560
        %562 = vrot.lane.b32.xlu0 %v541, 16
        %v563 = vpop.permute.xlu0 %562
        %564 = vrot.lane.b32.xlu0 %v542, 16
        %v565 = vpop.permute.xlu0 %564
        %566 = vrot.lane.b32.xlu0 %v543, 16
        %v567 = vpop.permute.xlu0 %566
        %568 = vrot.lane.b32.xlu0 %v544, 16
        %v569 = vpop.permute.xlu0 %568
        %570 = vrot.lane.b32.xlu0 %v545, 16
        %v571 = vpop.permute.xlu0 %570
        %572 = vrot.lane.b32.xlu0 %v546, 16
        %v573 = vpop.permute.xlu0 %572
        %vm574 = vcmask 130048
        %v575 = vsel %vm574, %v557, %v559
        %v576 = vsel %vm574, %v559, %v561
        %v577 = vsel %vm574, %v563, %v565
        %v578 = vsel %vm574, %v565, %v567
        %v579 = vsel %vm574, %v569, %v571
        %v580 = vsel %vm574, %v571, %v573
        %v587 = vadd.f32 %v508, %v575
        %v588 = vadd.f32 %v509, %v576
        %v589 = vadd.f32 %v510, %v577
        %v590 = vadd.f32 %v511, %v578
        %v591 = vadd.f32 %v512, %v579
        %v592 = vadd.f32 %v513, %v580
        %v593 = vld [vmem:[#allocation2 + $0x8] sm:$0xff]
        %v594 = vld [vmem:[#allocation2 + $0x10] sm:$0xff]
        %v595 = vld [vmem:[#allocation2 + $0x18] sm:$0xff]
        %v596 = vld [vmem:[#allocation2 + $0x28] sm:$0xff]
        %v597 = vld [vmem:[#allocation2 + $0x30] sm:$0xff]
        %v598 = vld [vmem:[#allocation2 + $0x38] sm:$0xff]
        %v599 = vld [vmem:[#allocation2 + $0x48] sm:$0xff]
        %v600 = vld [vmem:[#allocation2 + $0x50] sm:$0xff]
        %v601 = vld [vmem:[#allocation2 + $0x58] sm:$0xff]
        %603 = vset.pattern.permute.xlu0 0
        %604 = vperm.xlu0 %603, %v349
        %v605 = vpop.permute.xlu0 %604
        %608 = vset.pattern.permute.xlu0 0
        %609 = vperm.xlu0 %608, %v350
        %v610 = vpop.permute.xlu0 %609
        %613 = vset.pattern.permute.xlu0 0
        %614 = vperm.xlu0 %613, %v351
        %v615 = vpop.permute.xlu0 %614
        %v617 = vmul.f32 %v593, %v605
        %v618 = vmul.f32 %v594, %v605
        %v619 = vmul.f32 %v595, %v605
        %v620 = vmul.f32 %v596, %v610
        %v621 = vmul.f32 %v597, %v610
        %v622 = vmul.f32 %v598, %v610
        %v623 = vmul.f32 %v599, %v615
        %v624 = vmul.f32 %v600, %v615
        %v625 = vmul.f32 %v601, %v615
        %635 = vrot.lane.b32.xlu0 %v617, 112
        %v636 = vpop.permute.xlu0 %635
        %637 = vrot.lane.b32.xlu0 %v618, 112
        %v638 = vpop.permute.xlu0 %637
        %639 = vrot.lane.b32.xlu0 %v619, 112
        %v640 = vpop.permute.xlu0 %639
        %641 = vrot.lane.b32.xlu0 %v620, 112
        %v642 = vpop.permute.xlu0 %641
        %643 = vrot.lane.b32.xlu0 %v621, 112
        %v644 = vpop.permute.xlu0 %643
        %645 = vrot.lane.b32.xlu0 %v622, 112
        %v646 = vpop.permute.xlu0 %645
        %647 = vrot.lane.b32.xlu0 %v623, 112
        %v648 = vpop.permute.xlu0 %647
        %649 = vrot.lane.b32.xlu0 %v624, 112
        %v650 = vpop.permute.xlu0 %649
        %651 = vrot.lane.b32.xlu0 %v625, 112
        %v652 = vpop.permute.xlu0 %651
        %vm653 = vcmask 916480
        %v654 = vsel %vm653, %v636, %v638
        %v655 = vsel %vm653, %v638, %v640
        %v656 = vsel %vm653, %v642, %v644
        %v657 = vsel %vm653, %v644, %v646
        %v658 = vsel %vm653, %v648, %v650
        %v659 = vsel %vm653, %v650, %v652
        %v666 = vadd.f32 %v587, %v654
        %v667 = vadd.f32 %v588, %v655
        %v668 = vadd.f32 %v589, %v656
        %v669 = vadd.f32 %v590, %v657
        %v670 = vadd.f32 %v591, %v658
        %v671 = vadd.f32 %v592, %v659
        %673 = vset.pattern.permute.xlu0 0
        %674 = vperm.xlu0 %673, %v318
        %v675 = vpop.permute.xlu0 %674
        %678 = vset.pattern.permute.xlu0 0
        %679 = vperm.xlu0 %678, %v319
        %v680 = vpop.permute.xlu0 %679
        %683 = vset.pattern.permute.xlu0 0
        %684 = vperm.xlu0 %683, %v320
        %v685 = vpop.permute.xlu0 %684
        %v687 = vadd.f32 %v666, %v675
        %v688 = vadd.f32 %v667, %v675
        %v689 = vadd.f32 %v668, %v680
        %v690 = vadd.f32 %v669, %v680
        %v691 = vadd.f32 %v670, %v685
        %v692 = vadd.f32 %v671, %v685
        %694 = vset.pattern.permute.xlu0 0
        %695 = vperm.xlu0 %694, %v321
        %v696 = vpop.permute.xlu0 %695
        %699 = vset.pattern.permute.xlu0 0
        %700 = vperm.xlu0 %699, %v322
        %v701 = vpop.permute.xlu0 %700
        %704 = vset.pattern.permute.xlu0 0
        %705 = vperm.xlu0 %704, %v323
        %v706 = vpop.permute.xlu0 %705
        %v708 = vmul.f32 %v514, %v696
        %v709 = vmul.f32 %v515, %v696
        %v710 = vmul.f32 %v516, %v696
        %v711 = vmul.f32 %v517, %v701
        %v712 = vmul.f32 %v518, %v701
        %v713 = vmul.f32 %v519, %v701
        %v714 = vmul.f32 %v520, %v706
        %v715 = vmul.f32 %v521, %v706
        %v716 = vmul.f32 %v522, %v706
        %718 = vset.pattern.permute.xlu0 0
        %719 = vperm.xlu0 %718, %v333
        %v720 = vpop.permute.xlu0 %719
        %723 = vset.pattern.permute.xlu0 0
        %724 = vperm.xlu0 %723, %v334
        %v725 = vpop.permute.xlu0 %724
        %728 = vset.pattern.permute.xlu0 0
        %729 = vperm.xlu0 %728, %v335
        %v730 = vpop.permute.xlu0 %729
        %v732 = vmul.f32 %v514, %v720
        %v733 = vmul.f32 %v515, %v720
        %v734 = vmul.f32 %v516, %v720
        %v735 = vmul.f32 %v517, %v725
        %v736 = vmul.f32 %v518, %v725
        %v737 = vmul.f32 %v519, %v725
        %v738 = vmul.f32 %v520, %v730
        %v739 = vmul.f32 %v521, %v730
        %v740 = vmul.f32 %v522, %v730
        %750 = vrot.lane.b32.xlu0 %v732, 112
        %v751 = vpop.permute.xlu0 %750
        %752 = vrot.lane.b32.xlu0 %v733, 112
        %v753 = vpop.permute.xlu0 %752
        %754 = vrot.lane.b32.xlu0 %v734, 112
        %v755 = vpop.permute.xlu0 %754
        %756 = vrot.lane.b32.xlu0 %v735, 112
        %v757 = vpop.permute.xlu0 %756
        %758 = vrot.lane.b32.xlu0 %v736, 112
        %v759 = vpop.permute.xlu0 %758
        %760 = vrot.lane.b32.xlu0 %v737, 112
        %v761 = vpop.permute.xlu0 %760
        %762 = vrot.lane.b32.xlu0 %v738, 112
        %v763 = vpop.permute.xlu0 %762
        %764 = vrot.lane.b32.xlu0 %v739, 112
        %v765 = vpop.permute.xlu0 %764
        %766 = vrot.lane.b32.xlu0 %v740, 112
        %v767 = vpop.permute.xlu0 %766
        %v768 = vsel %vm653, %v751, %v753
        %v769 = vsel %vm653, %v753, %v755
        %v770 = vsel %vm653, %v757, %v759
        %v771 = vsel %vm653, %v759, %v761
        %v772 = vsel %vm653, %v763, %v765
        %v773 = vsel %vm653, %v765, %v767
        %v783 = vadd.f32 %v708, %v768
        %v784 = vadd.f32 %v709, %v769
        %v785 = vadd.f32 %v710, %v755
        %v786 = vadd.f32 %v711, %v770
        %v787 = vadd.f32 %v712, %v771
        %v788 = vadd.f32 %v713, %v761
        %v789 = vadd.f32 %v714, %v772
        %v790 = vadd.f32 %v715, %v773
        %v791 = vadd.f32 %v716, %v767
        %793 = vset.pattern.permute.xlu0 0
        %794 = vperm.xlu0 %793, %v345
        %v795 = vpop.permute.xlu0 %794
        %798 = vset.pattern.permute.xlu0 0
        %799 = vperm.xlu0 %798, %v346
        %v800 = vpop.permute.xlu0 %799
        %803 = vset.pattern.permute.xlu0 0
        %804 = vperm.xlu0 %803, %v347
        %v805 = vpop.permute.xlu0 %804
        %v807 = vmul.f32 %v593, %v795
        %v808 = vmul.f32 %v594, %v795
        %v809 = vmul.f32 %v595, %v795
        %v810 = vmul.f32 %v596, %v800
        %v811 = vmul.f32 %v597, %v800
        %v812 = vmul.f32 %v598, %v800
        %v813 = vmul.f32 %v599, %v805
        %v814 = vmul.f32 %v600, %v805
        %v815 = vmul.f32 %v601, %v805
        %825 = vrot.lane.b32.xlu0 %v807, 96
        %v826 = vpop.permute.xlu0 %825
        %827 = vrot.lane.b32.xlu0 %v808, 96
        %v828 = vpop.permute.xlu0 %827
        %829 = vrot.lane.b32.xlu0 %v809, 96
        %v830 = vpop.permute.xlu0 %829
        %831 = vrot.lane.b32.xlu0 %v810, 96
        %v832 = vpop.permute.xlu0 %831
        %833 = vrot.lane.b32.xlu0 %v811, 96
        %v834 = vpop.permute.xlu0 %833
        %835 = vrot.lane.b32.xlu0 %v812, 96
        %v836 = vpop.permute.xlu0 %835
        %837 = vrot.lane.b32.xlu0 %v813, 96
        %v838 = vpop.permute.xlu0 %837
        %839 = vrot.lane.b32.xlu0 %v814, 96
        %v840 = vpop.permute.xlu0 %839
        %841 = vrot.lane.b32.xlu0 %v815, 96
        %v842 = vpop.permute.xlu0 %841
        %vm843 = vcmask 785408
        %v844 = vsel %vm843, %v826, %v828
        %v845 = vsel %vm843, %v828, %v830
        %v846 = vsel %vm843, %v832, %v834
        %v847 = vsel %vm843, %v834, %v836
        %v848 = vsel %vm843, %v838, %v840
        %v849 = vsel %vm843, %v840, %v842
        %v859 = vadd.f32 %v783, %v826
        %v860 = vadd.f32 %v784, %v844
        %v861 = vadd.f32 %v785, %v845
        %v862 = vadd.f32 %v786, %v832
        %v863 = vadd.f32 %v787, %v846
        %v864 = vadd.f32 %v788, %v847
        %v865 = vadd.f32 %v789, %v838
        %v866 = vadd.f32 %v790, %v848
        %v867 = vadd.f32 %v791, %v849
        %869 = vset.pattern.permute.xlu0 0
        %870 = vperm.xlu0 %869, %v329
        %v871 = vpop.permute.xlu0 %870
        %874 = vset.pattern.permute.xlu0 0
        %875 = vperm.xlu0 %874, %v330
        %v876 = vpop.permute.xlu0 %875
        %879 = vset.pattern.permute.xlu0 0
        %880 = vperm.xlu0 %879, %v331
        %v881 = vpop.permute.xlu0 %880
        %v883 = vmul.f32 %v514, %v871
        %v884 = vmul.f32 %v515, %v871
        %v885 = vmul.f32 %v516, %v871
        %v886 = vmul.f32 %v517, %v876
        %v887 = vmul.f32 %v518, %v876
        %v888 = vmul.f32 %v519, %v876
        %v889 = vmul.f32 %v520, %v881
        %v890 = vmul.f32 %v521, %v881
        %v891 = vmul.f32 %v522, %v881
        %893 = vset.pattern.permute.xlu0 0
        %894 = vperm.xlu0 %893, %v341
        %v895 = vpop.permute.xlu0 %894
        %898 = vset.pattern.permute.xlu0 0
        %899 = vperm.xlu0 %898, %v342
        %v900 = vpop.permute.xlu0 %899
        %903 = vset.pattern.permute.xlu0 0
        %904 = vperm.xlu0 %903, %v343
        %v905 = vpop.permute.xlu0 %904
        %v907 = vmul.f32 %v593, %v895
        %v908 = vmul.f32 %v594, %v895
        %v909 = vmul.f32 %v595, %v895
        %v910 = vmul.f32 %v596, %v900
        %v911 = vmul.f32 %v597, %v900
        %v912 = vmul.f32 %v598, %v900
        %v913 = vmul.f32 %v599, %v905
        %v914 = vmul.f32 %v600, %v905
        %v915 = vmul.f32 %v601, %v905
        %925 = vrot.lane.b32.xlu0 %v907, 112
        %v926 = vpop.permute.xlu0 %925
        %927 = vrot.lane.b32.xlu0 %v908, 112
        %v928 = vpop.permute.xlu0 %927
        %929 = vrot.lane.b32.xlu0 %v909, 112
        %v930 = vpop.permute.xlu0 %929
        %931 = vrot.lane.b32.xlu0 %v910, 112
        %v932 = vpop.permute.xlu0 %931
        %933 = vrot.lane.b32.xlu0 %v911, 112
        %v934 = vpop.permute.xlu0 %933
        %935 = vrot.lane.b32.xlu0 %v912, 112
        %v936 = vpop.permute.xlu0 %935
        %937 = vrot.lane.b32.xlu0 %v913, 112
        %v938 = vpop.permute.xlu0 %937
        %939 = vrot.lane.b32.xlu0 %v914, 112
        %v940 = vpop.permute.xlu0 %939
        %941 = vrot.lane.b32.xlu0 %v915, 112
        %v942 = vpop.permute.xlu0 %941
        %v943 = vsel %vm653, %v926, %v928
        %v944 = vsel %vm653, %v928, %v930
        %v945 = vsel %vm653, %v932, %v934
        %v946 = vsel %vm653, %v934, %v936
        %v947 = vsel %vm653, %v938, %v940
        %v948 = vsel %vm653, %v940, %v942
        %v958 = vadd.f32 %v883, %v926
        %v959 = vadd.f32 %v884, %v943
        %v960 = vadd.f32 %v885, %v944
        %v961 = vadd.f32 %v886, %v932
        %v962 = vadd.f32 %v887, %v945
        %v963 = vadd.f32 %v888, %v946
        %v964 = vadd.f32 %v889, %v938
        %v965 = vadd.f32 %v890, %v947
        %v966 = vadd.f32 %v891, %v948
        %968 = vset.pattern.permute.xlu0 0
        %969 = vperm.xlu0 %968, %v353
        %v970 = vpop.permute.xlu0 %969
        %973 = vset.pattern.permute.xlu0 0
        %974 = vperm.xlu0 %973, %v354
        %v975 = vpop.permute.xlu0 %974
        %978 = vset.pattern.permute.xlu0 0
        %979 = vperm.xlu0 %978, %v355
        %v980 = vpop.permute.xlu0 %979
        %v982 = vmul.f32 %v593, %v970
        %v983 = vmul.f32 %v594, %v970
        %v984 = vmul.f32 %v595, %v970
        %v985 = vmul.f32 %v596, %v975
        %v986 = vmul.f32 %v597, %v975
        %v987 = vmul.f32 %v598, %v975
        %v988 = vmul.f32 %v599, %v980
        %v989 = vmul.f32 %v600, %v980
        %v990 = vmul.f32 %v601, %v980
        %1000 = vrot.lane.b32.xlu0 %v982, 96
        %v1001 = vpop.permute.xlu0 %1000
        %1002 = vrot.lane.b32.xlu0 %v983, 96
        %v1003 = vpop.permute.xlu0 %1002
        %1004 = vrot.lane.b32.xlu0 %v984, 96
        %v1005 = vpop.permute.xlu0 %1004
        %1006 = vrot.lane.b32.xlu0 %v985, 96
        %v1007 = vpop.permute.xlu0 %1006
        %1008 = vrot.lane.b32.xlu0 %v986, 96
        %v1009 = vpop.permute.xlu0 %1008
        %1010 = vrot.lane.b32.xlu0 %v987, 96
        %v1011 = vpop.permute.xlu0 %1010
        %1012 = vrot.lane.b32.xlu0 %v988, 96
        %v1013 = vpop.permute.xlu0 %1012
        %1014 = vrot.lane.b32.xlu0 %v989, 96
        %v1015 = vpop.permute.xlu0 %1014
        %1016 = vrot.lane.b32.xlu0 %v990, 96
        %v1017 = vpop.permute.xlu0 %1016
        %v1018 = vsel %vm843, %v1001, %v1003
        %v1019 = vsel %vm843, %v1003, %v1005
        %v1020 = vsel %vm843, %v1007, %v1009
        %v1021 = vsel %vm843, %v1009, %v1011
        %v1022 = vsel %vm843, %v1013, %v1015
        %v1023 = vsel %vm843, %v1015, %v1017
        %v1033 = vadd.f32 %v958, %v1001
        %v1034 = vadd.f32 %v959, %v1018
        %v1035 = vadd.f32 %v960, %v1019
        %v1036 = vadd.f32 %v961, %v1007
        %v1037 = vadd.f32 %v962, %v1020
        %v1038 = vadd.f32 %v963, %v1021
        %v1039 = vadd.f32 %v964, %v1013
        %v1040 = vadd.f32 %v965, %v1022
        %v1041 = vadd.f32 %v966, %v1023
        %v1043 = vlaneseq
        %v1044 = vshrl.u32 %v1043, 7
        %v1045 = vsub.s32 0, %v1044
        %v1046 = vrot.slane %v356, %v1045
        %v1047 = vlaneseq
        %v1048 = vshrl.u32 %v1047, 7
        %v1049 = vsub.s32 1, %v1048
        %v1050 = vrot.slane %v356, %v1049
        %1062 = vrot.lane.b32.xlu0 %v859, 17
        %v1063 = vpop.permute.xlu0 %1062
        %1064 = vrot.lane.b32.xlu0 %v860, 17
        %v1065 = vpop.permute.xlu0 %1064
        %1066 = vrot.lane.b32.xlu0 %v861, 17
        %v1067 = vpop.permute.xlu0 %1066
        %1068 = vrot.lane.b32.xlu0 %v862, 17
        %v1069 = vpop.permute.xlu0 %1068
        %1070 = vrot.lane.b32.xlu0 %v863, 17
        %v1071 = vpop.permute.xlu0 %1070
        %1072 = vrot.lane.b32.xlu0 %v864, 17
        %v1073 = vpop.permute.xlu0 %1072
        %1074 = vrot.lane.b32.xlu0 %v865, 17
        %v1075 = vpop.permute.xlu0 %1074
        %1076 = vrot.lane.b32.xlu0 %v866, 17
        %v1077 = vpop.permute.xlu0 %1076
        %1078 = vrot.lane.b32.xlu0 %v867, 17
        %v1079 = vpop.permute.xlu0 %1078
        %vm1080 = vcmask 138240
        %v1081 = vsel %vm1080, %v1063, %v1065
        %v1082 = vsel %vm1080, %v1065, %v1067
        %v1083 = vsel %vm1080, %v1069, %v1071
        %v1084 = vsel %vm1080, %v1071, %v1073
        %v1085 = vsel %vm1080, %v1075, %v1077
        %v1086 = vsel %vm1080, %v1077, %v1079
        %v1093 = vmul.f32 %v1046, %v1081
        %v1094 = vmul.f32 %v1050, %v1082
        %v1095 = vmul.f32 %v1046, %v1083
        %v1096 = vmul.f32 %v1050, %v1084
        %v1097 = vmul.f32 %v1046, %v1085
        %v1098 = vmul.f32 %v1050, %v1086
        %v1099 = vadd.f32 %v687, %v1093
        %v1100 = vadd.f32 %v688, %v1094
        %v1101 = vadd.f32 %v689, %v1095
        %v1102 = vadd.f32 %v690, %v1096
        %v1103 = vadd.f32 %v691, %v1097
        %v1104 = vadd.f32 %v692, %v1098
        %v1106 = vlaneseq
        %v1107 = vshrl.u32 %v1106, 7
        %v1108 = vsub.s32 0, %v1107
        %v1109 = vrot.slane %v358, %v1108
        %v1110 = vlaneseq
        %v1111 = vshrl.u32 %v1110, 7
        %v1112 = vsub.s32 1, %v1111
        %v1113 = vrot.slane %v358, %v1112
        %1125 = vrot.lane.b32.xlu0 %v1033, 15
        %v1126 = vpop.permute.xlu0 %1125
        %1127 = vrot.lane.b32.xlu0 %v1034, 15
        %v1128 = vpop.permute.xlu0 %1127
        %1129 = vrot.lane.b32.xlu0 %v1035, 15
        %v1130 = vpop.permute.xlu0 %1129
        %1131 = vrot.lane.b32.xlu0 %v1036, 15
        %v1132 = vpop.permute.xlu0 %1131
        %1133 = vrot.lane.b32.xlu0 %v1037, 15
        %v1134 = vpop.permute.xlu0 %1133
        %1135 = vrot.lane.b32.xlu0 %v1038, 15
        %v1136 = vpop.permute.xlu0 %1135
        %1137 = vrot.lane.b32.xlu0 %v1039, 15
        %v1138 = vpop.permute.xlu0 %1137
        %1139 = vrot.lane.b32.xlu0 %v1040, 15
        %v1140 = vpop.permute.xlu0 %1139
        %1141 = vrot.lane.b32.xlu0 %v1041, 15
        %v1142 = vpop.permute.xlu0 %1141
        %vm1143 = vcmask 121856
        %v1144 = vsel %vm1143, %v1126, %v1128
        %v1145 = vsel %vm1143, %v1128, %v1130
        %v1146 = vsel %vm1143, %v1132, %v1134
        %v1147 = vsel %vm1143, %v1134, %v1136
        %v1148 = vsel %vm1143, %v1138, %v1140
        %v1149 = vsel %vm1143, %v1140, %v1142
        %v1156 = vmul.f32 %v1109, %v1144
        %v1157 = vmul.f32 %v1113, %v1145
        %v1158 = vmul.f32 %v1109, %v1146
        %v1159 = vmul.f32 %v1113, %v1147
        %v1160 = vmul.f32 %v1109, %v1148
        %v1161 = vmul.f32 %v1113, %v1149
        %v1162 = vadd.f32 %v1099, %v1156
        %v1163 = vadd.f32 %v1100, %v1157
        %v1164 = vadd.f32 %v1101, %v1158
        %v1165 = vadd.f32 %v1102, %v1159
        %v1166 = vadd.f32 %v1103, %v1160
        %v1167 = vadd.f32 %v1104, %v1161
        %v1168 = vmax.f32 %v1162, 0.0
        %v1169 = vmax.f32 %v1163, 0.0
        %v1170 = vmax.f32 %v1164, 0.0
        %v1171 = vmax.f32 %v1165, 0.0
        %v1172 = vmax.f32 %v1166, 0.0
        %v1173 = vmax.f32 %v1167, 0.0
        %v1174 = vmin.f32 %v1168, 6.0
        %v1175 = vmin.f32 %v1169, 6.0
        %v1176 = vmin.f32 %v1170, 6.0
        %v1177 = vmin.f32 %v1171, 6.0
        %v1178 = vmin.f32 %v1172, 6.0
        %v1179 = vmin.f32 %v1173, 6.0
        %1181 = vset.pattern.permute.xlu0 0
        %1182 = vperm.xlu0 %1181, %v317
        %v1183 = vpop.permute.xlu0 %1182
        %vm1185 = vcmask 195584
        %v1187 = vsel %vm1185, %v313, 0
        %1189 = vmatprep.subr.mxu0 %v1175
        %1190 = vmatpush1.msra.mxu0 %v1174
        %1191 = vmatprep.subr.mxu0 %v1177
        %1192 = vmatpush1.msra.mxu0 %v1176
        %1193 = vmatprep.subr.mxu0 %v1179
        %1194 = vmatpush1.msra.mxu0 %v1178
        %1195 = vmatprep.subr.mxu0 0.0
        %1196 = vmatpush1.msra.mxu0 0.0
        %1197 = vmatprep.subr.mxu0 0.0
        %1198 = vmatpush1.msra.mxu0 0.0
        %1199 = vmatprep.subr.mxu0 0.0
        %1200 = vmatpush1.msra.mxu0 0.0
        %1201 = vmatprep.subr.mxu0 0.0
        %1202 = vmatpush1.msra.mxu0 0.0
        %1203 = vmatprep.subr.mxu0 0.0
        %1204 = vmatpush1.msra.mxu0 0.0
        %1205 = vmatprep.subr.mxu0 0.0
        %1206 = vmatpush1.msra.mxu0 0.0
        %1207 = vmatprep.subr.mxu0 0.0
        %1208 = vmatpush1.msra.mxu0 0.0
        %1209 = vmatprep.subr.mxu0 0.0
        %1210 = vmatpush1.msra.mxu0 0.0
        %1211 = vmatprep.subr.mxu0 0.0
        %1212 = vmatpush1.msra.mxu0 0.0
        %1213 = vmatprep.subr.mxu0 0.0
        %1214 = vmatpush1.msra.mxu0 0.0
        %1215 = vmatprep.subr.mxu0 0.0
        %1216 = vmatpush1.msra.mxu0 0.0
        %1217 = vmatprep.subr.mxu0 0.0
        %1218 = vmatpush1.msra.mxu0 0.0
        %1219 = vmatprep.subr.mxu0 0.0
        %1220 = vmatpush1.msra.mxu0 0.0
        %1221 = vmatprep.subr.mxu0 0.0
        %1222 = vmatpush1.msra.mxu0 0.0
        %1223 = vmatprep.subr.mxu0 0.0
        %1224 = vmatpush1.msra.mxu0 0.0
        %1225 = vmatprep.subr.mxu0 0.0
        %1226 = vmatpush1.msra.mxu0 0.0
        %1227 = vmatprep.subr.mxu0 0.0
        %1228 = vmatpush1.msra.mxu0 0.0
        %1229 = vmatprep.subr.mxu0 0.0
        %1230 = vmatpush1.msra.mxu0 0.0
        %1231 = vmatprep.subr.mxu0 0.0
        %1232 = vmatpush1.msra.mxu0 0.0
        %1233 = vmatprep.subr.mxu0 0.0
        %1234 = vmatpush1.msra.mxu0 0.0
        %1235 = vmatprep.subr.mxu0 0.0
        %1236 = vmatpush1.msra.mxu0 0.0
        %1237 = vmatprep.subr.mxu0 0.0
        %1238 = vmatpush1.msra.mxu0 0.0
        %1239 = vmatprep.subr.mxu0 0.0
        %1240 = vmatpush1.msra.mxu0 0.0
        %1241 = vmatprep.subr.mxu0 0.0
        %1242 = vmatpush1.msra.mxu0 0.0
        %1243 = vmatprep.subr.mxu0 0.0
        %1244 = vmatpush1.msra.mxu0 0.0
        %1245 = vmatprep.subr.mxu0 0.0
        %1246 = vmatpush1.msra.mxu0 0.0
        %1247 = vmatprep.subr.mxu0 0.0
        %1248 = vmatpush1.msra.mxu0 0.0
        %1249 = vmatprep.subr.mxu0 0.0
        %1250 = vmatpush1.msra.mxu0 0.0
        %1251 = vmatprep.subr.mxu0 0.0
        %1252 = vmatpush1.msra.mxu0 0.0
        %1253 = vmatprep.mubr.f32.mxu0 0.0
        %1254 = vmatmul.mubr.f32.gmra.mrb[0].mxu0 %v1187
        %v1255 = vpop.f32.mrb[0].mxu0
        %v1256 = vadd.f32 %v1183, %v1255
        %v1257 = vpop.f32.mrb[0].mxu0
        %v1258 = vadd.f32 %v1183, %v1257
        %1259 = vdwg.mxu0
        %v1260 = vld [vmem:[%s303] sm:$0xff]
        %v1262 = vcombine.high %v1260, %v1260
        %v1264 = vadd.f32 %v1256, %v1260
        %v1265 = vadd.f32 %v1258, %v1262
        %v1268 = vcombine.low %v1264, %v1265
        %1270 = vst [vmem:[%s298] sm:$0xff] %v1268
        %s1271 = sand.u32 %s203, 1
        %s1272 = scalar_lea.sflag [#allocation4], %s1271
        %s1273 = sand.u32 %s203, 1
        %s1274 = smul.addr %s1273, 8
        %s1275 = scalar_lea.vmem [#allocation3], %s1274
        // Predicated region
        $region53: #{tpu_custom_call.1} parent=51 // pred_check
          %p1276 = pneg %p213
        $region54: #{tpu_custom_call.1} parent=51 // pred_check_branch
          %1278 = sbr.rel (%p1276) target = $region56
        $region55: #{tpu_custom_call.1} parent=51 // pred_region
          %s1280 = ssub.s32 128, 128
          %1281 = vsyncadd %s1272, %s1280
          %s1282 = smul.addr %s22, 2
          %s1283 = smul.addr %s1282, 64
          %s1284 = scalar_lea.hbm %s8, %s1283
          %s1286 = sshll.u32 %s1275, 4
          %s1287 = int_to_ptr.vmem [resolvable:$true] %s1286
          %1289 = dma.vmem_to_hbm [thread:$0]  %s1287, 128, %s1284, %s1272
        $region56: #{tpu_custom_call.1} parent=51 // pred_fallthru
          _
      $region52: #{tpu_custom_call.1} parent=5 // pred_fallthru
        _
      %p1290 = scmp.le.s32.totalorder 2, %s17
      // Predicated region
      $region57: #{tpu_custom_call.1} parent=5 // pred_check
        %p1291 = pneg %p1290
      $region58: #{tpu_custom_call.1} parent=5 // pred_check_branch
        %1293 = sbr.rel (%p1291) target = $region60
      $region59: #{tpu_custom_call.1} parent=5 // pred_region
        %s1294 = ssub.s32 %s17, 2
        // Predicated region
        $region61: #{tpu_custom_call.1} parent=59 // pred_check
          %p1295 = pneg %p219
        $region62: #{tpu_custom_call.1} parent=59 // pred_check_branch
          %1297 = sbr.rel (%p1295) target = $region64
        $region63: #{tpu_custom_call.1} parent=59 // pred_region
          %s1298 = sand.u32 %s204, 1
          %s1299 = scalar_lea.sflag [#allocation4], %s1298
          %s1300 = sand.u32 %s204, 1
          %s1301 = smul.addr %s1300, 8
          %s1302 = scalar_lea.vmem [#allocation3], %s1301
          %1303 = dma.done %s1299, 128
        $region64: #{tpu_custom_call.1} parent=59 // pred_fallthru
          _
      $region60: #{tpu_custom_call.1} parent=5 // pred_fallthru
        _
    $region6: #{tpu_custom_call.1} parent=1 // loop_footer
      %s21 = sadd.s32 1, %s17
    $region7: #{tpu_custom_call.1} parent=1 // loop_footer_branch
      %16 = sbr.rel target = $region3
    $region8: #{tpu_custom_call.1} parent=1 // loop_exit
      _
    %1304 = vsyncpa [#allocation4], 1
    %s1305 = scalar_lea.sflag [#allocation4], 1
    %1306 = vsyncpa %s1305, 1

</llo_original>
